<compile_context>
chip_gen: v5e
topology: v5e:2x2
jax: 0.10.0
libtpu: 0.0.40
codegen_flags: <defaults>
</compile_context>

<pallas_src>
import math
from functools import partial

import numpy as np

import jax
import jax.numpy as jnp
from jax import lax
from jax.experimental import pallas as pl
from jax.experimental.pallas import tpu as pltpu


# ----------------------------------------------------------------------------
# Pallas kernels: bf16 matmul on the MXU + fused f32 epilogue (BN affine with the
# conv bias folded into the shift, optional residual add, optional ReLU).
# Scalar-prefetch arg 0 is the tile -> estimator map used by the weight BlockSpec.
# ----------------------------------------------------------------------------
def _conv_bn_kernel(eid_ref, p_ref, w_ref, scale_ref, shift_ref, o_ref, *, apply_relu):
    # p_ref: (TM, K) bf16;  w_ref: (K, Cp) bf16 (estimator dim squeezed, mask pre-folded)
    acc = jnp.dot(p_ref[...], w_ref[...], preferred_element_type=jnp.float32)  # (TM, Cp)
    y = acc * scale_ref[...] + shift_ref[...]
    if apply_relu:
        y = jnp.maximum(y, 0.0)
    o_ref[...] = y.astype(o_ref.dtype)


def _conv_bn_res_kernel(eid_ref, p_ref, w_ref, scale_ref, shift_ref, res_ref, o_ref,
                        *, apply_relu):
    acc = jnp.dot(p_ref[...], w_ref[...], preferred_element_type=jnp.float32)  # (TM, Cp)
    # residual arrives bf16; upcast before the f32 add / BN affine (residual pre-BN2)
    y = (acc + res_ref[...].astype(jnp.float32)) * scale_ref[...] + shift_ref[...]
    if apply_relu:
        y = jnp.maximum(y, 0.0)
    o_ref[...] = y.astype(o_ref.dtype)


def fused_conv_bn(e_of_tile, patches, w_e, scale, shift, res, apply_relu, tm, out_dtype):
    """patches: (R, K) bf16 (rows estimator-sorted and padded to a multiple of tm per
    estimator); w_e: (E, K, Cp) bf16; scale/shift: (1, Cp) f32; res: (R, Cp) bf16 or
    None; e_of_tile: (R//tm,) int32 tile -> estimator map."""
    R, K = patches.shape
    n_est, Kw, Cp = w_e.shape
    assert Kw == K and R % tm == 0
    n_tiles = R // tm
    has_res = res is not None

    kernel = partial(_conv_bn_res_kernel if has_res else _conv_bn_kernel,
                     apply_relu=apply_relu)

    in_specs = [
        pl.BlockSpec((tm, K), lambda t, e: (t, 0)),            # patch row tile (bf16)
        # per-estimator masked weights; estimator dim squeezed out of the kernel ref.
        # TODO(synk): pipeline_mode=pl.Buffered(1) would single-buffer this rarely-
        #             changing operand (block index only changes E times over the grid).
        pl.BlockSpec((None, K, Cp), lambda t, e: (e[t], 0, 0)),
        pl.BlockSpec((1, Cp), lambda t, e: (0, 0)),            # BN scale (f32)
        pl.BlockSpec((1, Cp), lambda t, e: (0, 0)),            # BN shift + folded bias
    ]
    args = [patches, w_e, scale, shift]
    if has_res:
        in_specs.append(pl.BlockSpec((tm, Cp), lambda t, e: (t, 0)))  # residual (bf16)
        args.append(res)

    out_itemsize = jnp.dtype(out_dtype).itemsize
    bytes_accessed = (R * K * 2                    # patch stream (bf16)
                      + n_est * K * Cp * 2         # per-estimator weights (bf16)
                      + R * Cp * out_itemsize      # output
                      + (R * Cp * 2 if has_res else 0)
                      + 2 * Cp * 4)                # scale/shift
    cost = pl.CostEstimate(flops=int(2 * R * K * Cp), transcendentals=0,
                           bytes_accessed=int(bytes_accessed))

    return pl.pallas_call(
        kernel,
        out_shape=jax.ShapeDtypeStruct((R, Cp), out_dtype),
        grid_spec=pltpu.PrefetchScalarGridSpec(
            num_scalar_prefetch=1,
            grid=(n_tiles,),
            in_specs=in_specs,
            out_specs=pl.BlockSpec((tm, Cp), lambda t, e: (t, 0)),
        ),
        compiler_params=pltpu.CompilerParams(
            dimension_semantics=("parallel",),
            vmem_limit_bytes=32 * 1024 * 1024),
        cost_estimate=cost,
    )(e_of_tile, *args)


# ----------------------------------------------------------------------------
# Host-side glue: im2col (bf16), per-estimator masked weight matrices, BN folding,
# VMEM-budgeted MXU-aligned row tiling with per-estimator row padding.
# ----------------------------------------------------------------------------
def _round_up(x, m):
    return ((x + m - 1) // m) * m


def im2col_nhwc(x, kh, kw, stride, pad):
    """NHWC bf16 -> flattened patch matrix (N*OH*OW, kh*kw*C) bf16 (MXU operand)."""
    N, H, W, C = x.shape
    xp = jnp.pad(x, ((0, 0), (pad, pad), (pad, pad), (0, 0)))
    OH = (H + 2 * pad - kh) // stride + 1
    OW = (W + 2 * pad - kw) // stride + 1
    taps = []
    for i in range(kh):
        for j in range(kw):
            taps.append(xp[:, i:i + stride * OH:stride, j:j + stride * OW:stride, :])
    p = jnp.stack(taps, axis=3)                          # (N, OH, OW, kh*kw, C)
    return p.reshape(N * OH * OW, kh * kw * C), OH, OW


def build_masked_weight_mats(w_oihw, groups, cin_total, masks_c, cout_pad):
    """PyTorch (Cout, Cin/g, KH, KW) weight -> (E, KH*KW*Cin_total, Cout_pad) bf16,
       with the per-estimator input-channel mask folded into the rows."""
    w = np.asarray(w_oihw)
    masks = np.asarray(masks_c, np.float32)               # (E, Cin_total)
    cout, cin_g, kh, kw = w.shape
    E = masks.shape[0]
    cout_g = cout // groups
    base = np.zeros((kh * kw * cin_total, cout), np.float32)
    for g in range(groups):
        for oc in range(cout_g):
            co = g * cout_g + oc
            for ic in range(cin_g):
                ci = g * cin_g + ic
                for i in range(kh):
                    for j in range(kw):
                        base[(i * kw + j) * cin_total + ci, co] = w[co, ic, i, j]
    mask_k = np.tile(masks, (1, kh * kw))                  # (E, K) tap-major / Cin-minor
    mats = base[None, :, :] * mask_k[:, :, None]           # (E, K, Cout)
    out = np.zeros((E, base.shape[0], cout_pad), np.float32)
    out[:, :, :cout] = mats
    return jnp.asarray(out, dtype=jnp.bfloat16)


def make_masks(num_estimators, channels, scale):
    """Deterministic binary Masksembles-style masks, shape (num_estimators, channels)."""
    n_keep = min(channels, max(1, int(math.ceil(channels / float(scale)))))
    m = np.zeros((num_estimators, channels), dtype=np.float32)
    for e in range(num_estimators):
        start = (e * channels) // num_estimators
        idx = (start + np.arange(n_keep)) % channels
        m[e, idx] = 1.0
    return m


def bn_fold(gamma, beta, mean, var, cout_pad, eps=1e-5):
    """BN(running stats) -> (scale, shift), one/zero padded to cout_pad, shape (1, Cp)."""
    scale = gamma / jnp.sqrt(var + eps)
    shift = beta - mean * scale
    pad = cout_pad - scale.shape[0]
    scale = jnp.concatenate([scale, jnp.ones((pad,), jnp.float32)])
    shift = jnp.concatenate([shift, jnp.zeros((pad,), jnp.float32)])
    return scale[None, :].astype(jnp.float32), shift[None, :].astype(jnp.float32)


def pick_tm(rows_per_est, K, Cp, res_itemsize, out_itemsize, vmem_budget=14 << 20):
    """Largest MXU-aligned row tile in {512,256,128} whose double-buffered working set
    (patch + out + residual tiles, plus double-buffered bf16 weights) fits the budget,
    capped at the 128-rounded rows-per-estimator.  Rows are zero-padded per estimator
    up to a multiple of tm, so no divisor search / ValueError on odd shapes."""
    w_bytes = 2 * K * Cp * 2
    per_row = 2 * (K * 2 + Cp * out_itemsize + Cp * res_itemsize)
    tm = 128
    for cand in (512, 256, 128):
        if w_bytes + cand * per_row <= vmem_budget:
            tm = cand
            break
    return min(tm, _round_up(rows_per_est, 128))


def _pad_rows(mat, E, rows_real, rows_pad):
    """(E*rows_real, C) -> (E*rows_pad, C), zero rows appended per estimator block."""
    if rows_pad == rows_real:
        return mat
    C = mat.shape[1]
    m = mat.reshape(E, rows_real, C)
    m = jnp.pad(m, ((0, 0), (0, rows_pad - rows_real), (0, 0)))
    return m.reshape(E * rows_pad, C)


def _unpad_rows(mat, E, rows_real, rows_pad):
    if rows_pad == rows_real:
        return mat
    C = mat.shape[1]
    return mat.reshape(E, rows_pad, C)[:, :rows_real, :].reshape(E * rows_real, C)


def _tile_map(E, rows_pad, tm):
    return jnp.asarray(np.repeat(np.arange(E, dtype=np.int32), rows_pad // tm))


# ----------------------------------------------------------------------------
# The block
# ----------------------------------------------------------------------------
class WideBasicBlockPallas:
    def __init__(self, in_planes, planes, dropout_rate, stride, num_estimators,
                 scale, groups, key):
        self.in_planes, self.planes = in_planes, planes
        self.stride, self.groups = stride, groups
        self.num_estimators = num_estimators
        self.has_conv_shortcut = (stride != 1) or (in_planes != planes)
        self.cout_pad = _round_up(planes, 128)             # lane-dense output channels

        ks = jax.random.split(key, 12)
        self.w1 = 0.1 * jax.random.normal(ks[0], (planes, in_planes // groups, 3, 3), jnp.float32)
        self.w2 = 0.1 * jax.random.normal(ks[1], (planes, planes // groups, 3, 3), jnp.float32)
        self.g1 = 0.5 + jax.random.uniform(ks[2], (planes,), jnp.float32)
        self.b1 = 0.1 * jax.random.normal(ks[3], (planes,), jnp.float32)
        self.m1 = 0.1 * jax.random.normal(ks[4], (planes,), jnp.float32)
        self.v1 = 0.5 + jax.random.uniform(ks[5], (planes,), jnp.float32)
        self.g2 = 0.5 + jax.random.uniform(ks[6], (planes,), jnp.float32)
        self.b2 = 0.1 * jax.random.normal(ks[7], (planes,), jnp.float32)
        self.m2 = 0.1 * jax.random.normal(ks[8], (planes,), jnp.float32)
        self.v2 = 0.5 + jax.random.uniform(ks[9], (planes,), jnp.float32)
        if self.has_conv_shortcut:
            self.ws = 0.1 * jax.random.normal(ks[10], (planes, in_planes // groups, 1, 1), jnp.float32)
            self.bs = 0.1 * jax.random.normal(ks[11], (planes,), jnp.float32)

        # one Masksembles mask buffer per MaskedConv2d
        self.mask_c1 = make_masks(num_estimators, in_planes, scale)
        self.mask_c2 = make_masks(num_estimators, planes, scale)
        if self.has_conv_shortcut:
            self.mask_cs = make_masks(num_estimators, in_planes, scale)

        # per-estimator masked (K, Cout_pad) bf16 weight matrices (mask folded in)
        self.w1_mats = build_masked_weight_mats(self.w1, groups, in_planes,
                                                self.mask_c1, self.cout_pad)
        self.w2_mats = build_masked_weight_mats(self.w2, groups, planes,
                                                self.mask_c2, self.cout_pad)
        # folded BN affines (f32 epilogue parameters), padded to Cout_pad
        self.s1, self.h1 = bn_fold(self.g1, self.b1, self.m1, self.v1, self.cout_pad)
        self.s2, self.h2 = bn_fold(self.g2, self.b2, self.m2, self.v2, self.cout_pad)
        if self.has_conv_shortcut:
            self.ws_mats = build_masked_weight_mats(self.ws, groups, in_planes,
                                                    self.mask_cs, self.cout_pad)
            # shortcut has no BN: scale=1, conv bias folded into shift
            self.sc_scale = jnp.ones((1, self.cout_pad), jnp.float32)
            self.sc_shift = jnp.concatenate(
                [self.bs, jnp.zeros((self.cout_pad - planes,), jnp.float32)])[None, :]

    # ------------------------- Pallas forward (NCHW in / NCHW out) -----------
    def forward_pallas(self, x_nchw):
        N = x_nchw.shape[0]
        E = self.num_estimators
        assert N % E == 0, "batch must be divisible by num_estimators"
        x = jnp.transpose(x_nchw, (0, 2, 3, 1)).astype(jnp.bfloat16)   # NHWC bf16
        P, Cp = self.planes, self.cout_pad
        n_per_e = N // E

        # conv1 (masked 3x3, pad 1, no bias) -> dropout(identity) -> bn1 -> relu  [bf16 out]
        p1, oh1, ow1 = im2col_nhwc(x, 3, 3, 1, 1)
        K1 = p1.shape[1]
        rows1 = n_per_e * oh1 * ow1
        tm1 = pick_tm(rows1, K1, Cp, res_itemsize=0, out_itemsize=2)
        Rp1 = _round_up(rows1, tm1)
        out1 = fused_conv_bn(_tile_map(E, Rp1, tm1), _pad_rows(p1, E, rows1, Rp1),
                             self.w1_mats, self.s1, self.h1,
                             res=None, apply_relu=True, tm=tm1,
                             out_dtype=jnp.bfloat16)                   # (E*Rp1, Cp) bf16
        out1 = _unpad_rows(out1, E, rows1, Rp1)
        out1_nhwc = out1.reshape(N, oh1, ow1, Cp)[..., :P]             # bf16

        # conv2 geometry (3x3, pad 1, stride s); shortcut shares the same output rows
        p2, oh2, ow2 = im2col_nhwc(out1_nhwc, 3, 3, self.stride, 1)
        K2 = p2.shape[1]
        rows2 = n_per_e * oh2 * ow2
        tm2 = pick_tm(rows2, K2, Cp, res_itemsize=2, out_itemsize=4)
        Rp2 = _round_up(rows2, tm2)
        e2 = _tile_map(E, Rp2, tm2)

        # shortcut -> bf16 residual in conv2's padded row layout (never f32, never 9x)
        if self.has_conv_shortcut:
            ps, ohs, ows = im2col_nhwc(x, 1, 1, self.stride, 0)
            assert (ohs, ows) == (oh2, ow2)
            sc = fused_conv_bn(e2, _pad_rows(ps, E, rows2, Rp2),
                               self.ws_mats, self.sc_scale, self.sc_shift,
                               res=None, apply_relu=False, tm=tm2,
                               out_dtype=jnp.bfloat16)                 # (E*Rp2, Cp) bf16
        else:
            # identity shortcut: channel-pad in bf16 (no f32 materialization)
            sc = jnp.pad(x, ((0, 0), (0, 0), (0, 0), (0, Cp - P)))
            sc = _pad_rows(sc.reshape(N * oh2 * ow2, Cp), E, rows2, Rp2)

        # conv2 (masked 3x3, stride, pad 1, no bias) + shortcut -> bn2 -> relu  [f32 out]
        out2 = fused_conv_bn(e2, _pad_rows(p2, E, rows2, Rp2),
                             self.w2_mats, self.s2, self.h2,
                             res=sc, apply_relu=True, tm=tm2,
                             out_dtype=jnp.float32)                    # (E*Rp2, Cp) f32
        out2 = _unpad_rows(out2, E, rows2, Rp2).reshape(N, oh2, ow2, Cp)[..., :P]
        return jnp.transpose(out2, (0, 3, 1, 2))

    # ------------------------- pure-JAX reference ----------------------------
    # Matmul operands and residuals are rounded to bf16 (mirroring the kernel's MXU
    # operands and bf16 intermediates); accumulation and the epilogue stay in f32.
    def forward_ref(self, x_nchw):
        N = x_nchw.shape[0]
        est_idx = np.repeat(np.arange(self.num_estimators), N // self.num_estimators)

        def r(v):
            return v.astype(jnp.bfloat16).astype(jnp.float32)

        def mconv(x, mask_c, w, b, stride, pad):
            m = jnp.asarray(mask_c)[est_idx][:, :, None, None]
            y = lax.conv_general_dilated(
                r(x) * m, r(w), (stride, stride), [(pad, pad), (pad, pad)],
                dimension_numbers=("NCHW", "OIHW", "NCHW"),
                feature_group_count=self.groups,
                precision=lax.Precision.HIGHEST)
            return y if b is None else y + b[None, :, None, None]

        def bn(x, g, b, mu, v):
            return (x - mu[None, :, None, None]) / jnp.sqrt(v[None, :, None, None] + 1e-5) \
                   * g[None, :, None, None] + b[None, :, None, None]

        out = jax.nn.relu(bn(mconv(x_nchw, self.mask_c1, self.w1, None, 1, 1),
                             self.g1, self.b1, self.m1, self.v1))
        out = mconv(out, self.mask_c2, self.w2, None, self.stride, 1)
        if self.has_conv_shortcut:
            out = out + r(mconv(x_nchw, self.mask_cs, self.ws, self.bs, self.stride, 0))
        else:
            out = out + r(x_nchw)
        return jax.nn.relu(bn(out, self.g2, self.b2, self.m2, self.v2))


# ----------------------------------------------------------------------------
if __name__ == "__main__":
    key = jax.random.PRNGKey(0)
    k_blockA, k_blockB, k_xA, k_xB = jax.random.split(key, 4)

    # config A: conv shortcut (stride=2, in_planes != planes), groups=1
    blockA = WideBasicBlockPallas(in_planes=4, planes=8, dropout_rate=0.0, stride=2,
                                  num_estimators=2, scale=2.0, groups=1, key=k_blockA)
    xA = jax.random.normal(k_xA, (4, 4, 16, 16), jnp.float32)   # NCHW
    yA = jax.block_until_ready(jax.jit(blockA.forward_pallas)(xA))
    rA = jax.block_until_ready(blockA.forward_ref(xA))
    np.testing.assert_allclose(np.asarray(yA), np.asarray(rA), rtol=5e-3, atol=5e-3)
    assert yA.shape == (4, 8, 8, 8)

    # config B: identity shortcut (stride=1, in_planes == planes), groups=2
    blockB = WideBasicBlockPallas(in_planes=8, planes=8, dropout_rate=0.1, stride=1,
                                  num_estimators=2, scale=2.0, groups=2, key=k_blockB)
    xB = jax.random.normal(k_xB, (4, 8, 16, 16), jnp.float32)   # NCHW
    yB = jax.block_until_ready(jax.jit(blockB.forward_pallas)(xB))
    rB = jax.block_until_ready(blockB.forward_ref(xB))
    np.testing.assert_allclose(np.asarray(yB), np.asarray(rB), rtol=5e-3, atol=5e-3)
    assert yB.shape == (4, 8, 16, 16)

    print("KERNEL_OK")
</pallas_src>

<mosaic_0001>
module attributes {stable_mosaic.version = 11 : i64} {
  func.func @_conv_bn_kernel(%arg0: i32, %arg1: memref<2xi32, #tpu.memory_space<smem>>, %arg2: memref<512x36xbf16, #tpu.memory_space<vmem>>, %arg3: memref<1x36x128xbf16, #tpu.memory_space<vmem>>, %arg4: memref<1x128xf32, #tpu.memory_space<vmem>>, %arg5: memref<1x128xf32, #tpu.memory_space<vmem>>, %arg6: memref<512x128xbf16, #tpu.memory_space<vmem>>) attributes {dimension_semantics = [#tpu.dimension_semantics<parallel>], iteration_bounds = array<i64: 2>, scalar_prefetch = 1 : i64, scratch_operands = 0 : i64, tpu.core_type = #tpu.core_type<tc>, window_params = [{transform_indices = @transform_0, window_bounds = array<i64: 512, 36>}, {transform_indices = @transform_1, window_bounds = array<i64: 1, 36, 128>}, {pipeline_mode = #tpu.pipeline_mode<synchronous>, transform_indices = @transform_2, window_bounds = array<i64: 1, 128>}, {pipeline_mode = #tpu.pipeline_mode<synchronous>, transform_indices = @transform_3, window_bounds = array<i64: 1, 128>}, {transform_indices = @transform_4, window_bounds = array<i64: 512, 128>}]} {
    %c0 = arith.constant 0 : index
    %c0_0 = arith.constant 0 : index
    %0 = vector.load %arg2[%c0, %c0_0] : memref<512x36xbf16, #tpu.memory_space<vmem>>, vector<512x36xbf16>
    %c0_1 = arith.constant 0 : index
    %c0_2 = arith.constant 0 : index
    %c0_3 = arith.constant 0 : index
    %1 = vector.load %arg3[%c0_1, %c0_2, %c0_3] : memref<1x36x128xbf16, #tpu.memory_space<vmem>>, vector<1x36x128xbf16>
    %2 = vector.shape_cast %1 : vector<1x36x128xbf16> to vector<36x128xbf16>
    %cst = arith.constant dense<0.000000e+00> : vector<512x128xf32>
    %3 = tpu.matmul %0, %2, %cst {dimension_numbers = #tpu.dot_dimension_numbers<[1], [0], [0], [1], [0, 0, 1, 1], [], []>} : vector<512x36xbf16>, vector<36x128xbf16>, vector<512x128xf32> -> vector<512x128xf32>
    %c0_4 = arith.constant 0 : index
    %c0_5 = arith.constant 0 : index
    %4 = vector.load %arg4[%c0_4, %c0_5] : memref<1x128xf32, #tpu.memory_space<vmem>>, vector<1x128xf32>
    %5 = vector.broadcast %4 : vector<1x128xf32> to vector<512x128xf32>
    %6 = arith.mulf %3, %5 : vector<512x128xf32>
    %c0_6 = arith.constant 0 : index
    %c0_7 = arith.constant 0 : index
    %7 = vector.load %arg5[%c0_6, %c0_7] : memref<1x128xf32, #tpu.memory_space<vmem>>, vector<1x128xf32>
    %8 = vector.broadcast %7 : vector<1x128xf32> to vector<512x128xf32>
    %9 = arith.addf %6, %8 : vector<512x128xf32>
    %cst_8 = arith.constant 0.000000e+00 : f32
    %10 = vector.broadcast %cst_8 : f32 to vector<512x128xf32>
    %11 = arith.maximumf %9, %10 : vector<512x128xf32>
    %12 = arith.truncf %11 : vector<512x128xf32> to vector<512x128xbf16>
    %c0_9 = arith.constant 0 : index
    %c0_10 = arith.constant 0 : index
    %13 = vector.load %arg6[%c0_9, %c0_10] : memref<512x128xbf16, #tpu.memory_space<vmem>>, vector<512x128xbf16>
    tpu.vector_store %arg6[%c0_9, %c0_10], %12 {strides = array<i32>} : memref<512x128xbf16, #tpu.memory_space<vmem>>, vector<512x128xbf16>,
    return
  }
  func.func @transform_0(%arg0: i32, %arg1: memref<2xi32, #tpu.memory_space<smem>>) -> (i32, i32) {
    %c0_i32 = arith.constant 0 : i32
    %c0_i32_0 = arith.constant 0 : i32
    return %arg0, %c0_i32 : i32, i32
  }
  func.func @transform_1(%arg0: i32, %arg1: memref<2xi32, #tpu.memory_space<smem>>) -> (i32, i32, i32) {
    %0 = arith.index_cast %arg0 : i32 to index
    %1 = memref.load %arg1[%0] : memref<2xi32, #tpu.memory_space<smem>>
    %c0_i32 = arith.constant 0 : i32
    %c0_i32_0 = arith.constant 0 : i32
    %c0_i32_1 = arith.constant 0 : i32
    return %1, %c0_i32, %c0_i32_0 : i32, i32, i32
  }
  func.func @transform_2(%arg0: i32, %arg1: memref<2xi32, #tpu.memory_space<smem>>) -> (i32, i32) {
    %c0_i32 = arith.constant 0 : i32
    %c0_i32_0 = arith.constant 0 : i32
    %c0_i32_1 = arith.constant 0 : i32
    return %c0_i32, %c0_i32_0 : i32, i32
  }
  func.func @transform_3(%arg0: i32, %arg1: memref<2xi32, #tpu.memory_space<smem>>) -> (i32, i32) {
    %c0_i32 = arith.constant 0 : i32
    %c0_i32_0 = arith.constant 0 : i32
    %c0_i32_1 = arith.constant 0 : i32
    return %c0_i32, %c0_i32_0 : i32, i32
  }
  func.func @transform_4(%arg0: i32, %arg1: memref<2xi32, #tpu.memory_space<smem>>) -> (i32, i32) {
    %c0_i32 = arith.constant 0 : i32
    %c0_i32_0 = arith.constant 0 : i32
    return %arg0, %c0_i32 : i32, i32
  }
}

module attributes {stable_mosaic.version = 11 : i64} {
  func.func @_conv_bn_kernel(%arg0: i32, %arg1: memref<2xi32, #tpu.memory_space<smem>>, %arg2: memref<128x4xbf16, #tpu.memory_space<vmem>>, %arg3: memref<1x4x128xbf16, #tpu.memory_space<vmem>>, %arg4: memref<1x128xf32, #tpu.memory_space<vmem>>, %arg5: memref<1x128xf32, #tpu.memory_space<vmem>>, %arg6: memref<128x128xbf16, #tpu.memory_space<vmem>>) attributes {dimension_semantics = [#tpu.dimension_semantics<parallel>], iteration_bounds = array<i64: 2>, scalar_prefetch = 1 : i64, scratch_operands = 0 : i64, tpu.core_type = #tpu.core_type<tc>, window_params = [{transform_indices = @transform_0, window_bounds = array<i64: 128, 4>}, {transform_indices = @transform_1, window_bounds = array<i64: 1, 4, 128>}, {pipeline_mode = #tpu.pipeline_mode<synchronous>, transform_indices = @transform_2, window_bounds = array<i64: 1, 128>}, {pipeline_mode = #tpu.pipeline_mode<synchronous>, transform_indices = @transform_3, window_bounds = array<i64: 1, 128>}, {transform_indices = @transform_4, window_bounds = array<i64: 128, 128>}]} {
    %c0 = arith.constant 0 : index
    %c0_0 = arith.constant 0 : index
    %0 = vector.load %arg2[%c0, %c0_0] : memref<128x4xbf16, #tpu.memory_space<vmem>>, vector<128x4xbf16>
    %c0_1 = arith.constant 0 : index
    %c0_2 = arith.constant 0 : index
    %c0_3 = arith.constant 0 : index
    %1 = vector.load %arg3[%c0_1, %c0_2, %c0_3] : memref<1x4x128xbf16, #tpu.memory_space<vmem>>, vector<1x4x128xbf16>
    %2 = vector.shape_cast %1 : vector<1x4x128xbf16> to vector<4x128xbf16>
    %cst = arith.constant dense<0.000000e+00> : vector<128x128xf32>
    %3 = tpu.matmul %0, %2, %cst {dimension_numbers = #tpu.dot_dimension_numbers<[1], [0], [0], [1], [0, 0, 1, 1], [], []>} : vector<128x4xbf16>, vector<4x128xbf16>, vector<128x128xf32> -> vector<128x128xf32>
    %c0_4 = arith.constant 0 : index
    %c0_5 = arith.constant 0 : index
    %4 = vector.load %arg4[%c0_4, %c0_5] : memref<1x128xf32, #tpu.memory_space<vmem>>, vector<1x128xf32>
    %5 = vector.broadcast %4 : vector<1x128xf32> to vector<128x128xf32>
    %6 = arith.mulf %3, %5 : vector<128x128xf32>
    %c0_6 = arith.constant 0 : index
    %c0_7 = arith.constant 0 : index
    %7 = vector.load %arg5[%c0_6, %c0_7] : memref<1x128xf32, #tpu.memory_space<vmem>>, vector<1x128xf32>
    %8 = vector.broadcast %7 : vector<1x128xf32> to vector<128x128xf32>
    %9 = arith.addf %6, %8 : vector<128x128xf32>
    %10 = arith.truncf %9 : vector<128x128xf32> to vector<128x128xbf16>
    %c0_8 = arith.constant 0 : index
    %c0_9 = arith.constant 0 : index
    %11 = vector.load %arg6[%c0_8, %c0_9] : memref<128x128xbf16, #tpu.memory_space<vmem>>, vector<128x128xbf16>
    tpu.vector_store %arg6[%c0_8, %c0_9], %10 {strides = array<i32>} : memref<128x128xbf16, #tpu.memory_space<vmem>>, vector<128x128xbf16>,
    return
  }
  func.func @transform_0(%arg0: i32, %arg1: memref<2xi32, #tpu.memory_space<smem>>) -> (i32, i32) {
    %c0_i32 = arith.constant 0 : i32
    %c0_i32_0 = arith.constant 0 : i32
    return %arg0, %c0_i32 : i32, i32
  }
  func.func @transform_1(%arg0: i32, %arg1: memref<2xi32, #tpu.memory_space<smem>>) -> (i32, i32, i32) {
    %0 = arith.index_cast %arg0 : i32 to index
    %1 = memref.load %arg1[%0] : memref<2xi32, #tpu.memory_space<smem>>
    %c0_i32 = arith.constant 0 : i32
    %c0_i32_0 = arith.constant 0 : i32
    %c0_i32_1 = arith.constant 0 : i32
    return %1, %c0_i32, %c0_i32_0 : i32, i32, i32
  }
  func.func @transform_2(%arg0: i32, %arg1: memref<2xi32, #tpu.memory_space<smem>>) -> (i32, i32) {
    %c0_i32 = arith.constant 0 : i32
    %c0_i32_0 = arith.constant 0 : i32
    %c0_i32_1 = arith.constant 0 : i32
    return %c0_i32, %c0_i32_0 : i32, i32
  }
  func.func @transform_3(%arg0: i32, %arg1: memref<2xi32, #tpu.memory_space<smem>>) -> (i32, i32) {
    %c0_i32 = arith.constant 0 : i32
    %c0_i32_0 = arith.constant 0 : i32
    %c0_i32_1 = arith.constant 0 : i32
    return %c0_i32, %c0_i32_0 : i32, i32
  }
  func.func @transform_4(%arg0: i32, %arg1: memref<2xi32, #tpu.memory_space<smem>>) -> (i32, i32) {
    %c0_i32 = arith.constant 0 : i32
    %c0_i32_0 = arith.constant 0 : i32
    return %arg0, %c0_i32 : i32, i32
  }
}

module attributes {stable_mosaic.version = 11 : i64} {
  func.func @_conv_bn_res_kernel(%arg0: i32, %arg1: memref<2xi32, #tpu.memory_space<smem>>, %arg2: memref<128x72xbf16, #tpu.memory_space<vmem>>, %arg3: memref<1x72x128xbf16, #tpu.memory_space<vmem>>, %arg4: memref<1x128xf32, #tpu.memory_space<vmem>>, %arg5: memref<1x128xf32, #tpu.memory_space<vmem>>, %arg6: memref<128x128xbf16, #tpu.memory_space<vmem>>, %arg7: memref<128x128xf32, #tpu.memory_space<vmem>>) attributes {dimension_semantics = [#tpu.dimension_semantics<parallel>], iteration_bounds = array<i64: 2>, scalar_prefetch = 1 : i64, scratch_operands = 0 : i64, tpu.core_type = #tpu.core_type<tc>, window_params = [{transform_indices = @transform_0, window_bounds = array<i64: 128, 72>}, {transform_indices = @transform_1, window_bounds = array<i64: 1, 72, 128>}, {pipeline_mode = #tpu.pipeline_mode<synchronous>, transform_indices = @transform_2, window_bounds = array<i64: 1, 128>}, {pipeline_mode = #tpu.pipeline_mode<synchronous>, transform_indices = @transform_3, window_bounds = array<i64: 1, 128>}, {transform_indices = @transform_4, window_bounds = array<i64: 128, 128>}, {transform_indices = @transform_5, window_bounds = array<i64: 128, 128>}]} {
    %c0 = arith.constant 0 : index
    %c0_0 = arith.constant 0 : index
    %0 = vector.load %arg2[%c0, %c0_0] : memref<128x72xbf16, #tpu.memory_space<vmem>>, vector<128x72xbf16>
    %c0_1 = arith.constant 0 : index
    %c0_2 = arith.constant 0 : index
    %c0_3 = arith.constant 0 : index
    %1 = vector.load %arg3[%c0_1, %c0_2, %c0_3] : memref<1x72x128xbf16, #tpu.memory_space<vmem>>, vector<1x72x128xbf16>
    %2 = vector.shape_cast %1 : vector<1x72x128xbf16> to vector<72x128xbf16>
    %cst = arith.constant dense<0.000000e+00> : vector<128x128xf32>
    %3 = tpu.matmul %0, %2, %cst {dimension_numbers = #tpu.dot_dimension_numbers<[1], [0], [0], [1], [0, 0, 1, 1], [], []>} : vector<128x72xbf16>, vector<72x128xbf16>, vector<128x128xf32> -> vector<128x128xf32>
    %c0_4 = arith.constant 0 : index
    %c0_5 = arith.constant 0 : index
    %4 = vector.load %arg6[%c0_4, %c0_5] : memref<128x128xbf16, #tpu.memory_space<vmem>>, vector<128x128xbf16>
    %5 = arith.extf %4 : vector<128x128xbf16> to vector<128x128xf32>
    %6 = arith.addf %3, %5 : vector<128x128xf32>
    %c0_6 = arith.constant 0 : index
    %c0_7 = arith.constant 0 : index
    %7 = vector.load %arg4[%c0_6, %c0_7] : memref<1x128xf32, #tpu.memory_space<vmem>>, vector<1x128xf32>
    %8 = vector.broadcast %7 : vector<1x128xf32> to vector<128x128xf32>
    %9 = arith.mulf %6, %8 : vector<128x128xf32>
    %c0_8 = arith.constant 0 : index
    %c0_9 = arith.constant 0 : index
    %10 = vector.load %arg5[%c0_8, %c0_9] : memref<1x128xf32, #tpu.memory_space<vmem>>, vector<1x128xf32>
    %11 = vector.broadcast %10 : vector<1x128xf32> to vector<128x128xf32>
    %12 = arith.addf %9, %11 : vector<128x128xf32>
    %cst_10 = arith.constant 0.000000e+00 : f32
    %13 = vector.broadcast %cst_10 : f32 to vector<128x128xf32>
    %14 = arith.maximumf %12, %13 : vector<128x128xf32>
    %c0_11 = arith.constant 0 : index
    %c0_12 = arith.constant 0 : index
    %15 = vector.load %arg7[%c0_11, %c0_12] : memref<128x128xf32, #tpu.memory_space<vmem>>, vector<128x128xf32>
    tpu.vector_store %arg7[%c0_11, %c0_12], %14 {strides = array<i32>} : memref<128x128xf32, #tpu.memory_space<vmem>>, vector<128x128xf32>,
    return
  }
  func.func @transform_0(%arg0: i32, %arg1: memref<2xi32, #tpu.memory_space<smem>>) -> (i32, i32) {
    %c0_i32 = arith.constant 0 : i32
    %c0_i32_0 = arith.constant 0 : i32
    return %arg0, %c0_i32 : i32, i32
  }
  func.func @transform_1(%arg0: i32, %arg1: memref<2xi32, #tpu.memory_space<smem>>) -> (i32, i32, i32) {
    %0 = arith.index_cast %arg0 : i32 to index
    %1 = memref.load %arg1[%0] : memref<2xi32, #tpu.memory_space<smem>>
    %c0_i32 = arith.constant 0 : i32
    %c0_i32_0 = arith.constant 0 : i32
    %c0_i32_1 = arith.constant 0 : i32
    return %1, %c0_i32, %c0_i32_0 : i32, i32, i32
  }
  func.func @transform_2(%arg0: i32, %arg1: memref<2xi32, #tpu.memory_space<smem>>) -> (i32, i32) {
    %c0_i32 = arith.constant 0 : i32
    %c0_i32_0 = arith.constant 0 : i32
    %c0_i32_1 = arith.constant 0 : i32
    return %c0_i32, %c0_i32_0 : i32, i32
  }
  func.func @transform_3(%arg0: i32, %arg1: memref<2xi32, #tpu.memory_space<smem>>) -> (i32, i32) {
    %c0_i32 = arith.constant 0 : i32
    %c0_i32_0 = arith.constant 0 : i32
    %c0_i32_1 = arith.constant 0 : i32
    return %c0_i32, %c0_i32_0 : i32, i32
  }
  func.func @transform_4(%arg0: i32, %arg1: memref<2xi32, #tpu.memory_space<smem>>) -> (i32, i32) {
    %c0_i32 = arith.constant 0 : i32
    %c0_i32_0 = arith.constant 0 : i32
    return %arg0, %c0_i32 : i32, i32
  }
  func.func @transform_5(%arg0: i32, %arg1: memref<2xi32, #tpu.memory_space<smem>>) -> (i32, i32) {
    %c0_i32 = arith.constant 0 : i32
    %c0_i32_0 = arith.constant 0 : i32
    return %arg0, %c0_i32 : i32, i32
  }
}

</mosaic_0001>

<llo_original>
// kernel: forward_pallas.3
$region0: #{forward_pallas.3}
  #allocation0 [shape = 'u32[]', space=smem, size = 0x4, offset = 0x4, fixed_abs, tag = 'smem constant byte address 0x4 - core index']
  #allocation1 [shape = 'u32[72,128]{1,0:T(1,128)}', space=vmem, size = 0x9000, scoped, tag = 'internal scratch']
  #allocation2 [shape = 's32[1]{0}', space=sflag, size = 0x4, scoped, tag = 'scoped memory for forward_pallas.3']
  #allocation3 [shape = 'u8[512]{0}', space=smem, size = 0x200, scoped, tag = 'prefetched SMEM operand 0']
  %s0 = inlined_call_operand.vmem [shape: s32[2], index: 0, kind: input, shape index: {}]
  %s1 = inlined_call_operand.vmem [shape: bf16[1024,36], index: 1, kind: input, shape index: {}]
  %s2 = inlined_call_operand.vmem [shape: bf16[2,36,128], index: 2, kind: input, shape index: {}]
  %s3 = inlined_call_operand.vmem [shape: f32[1,128], index: 3, kind: input, shape index: {}]
  %s4 = inlined_call_operand.vmem [shape: f32[1,128], index: 4, kind: input, shape index: {}]
  %s5 = inlined_call_operand.vmem [shape: bf16[1024,128], index: 5, kind: output, shape index: {}]
  %s6 = sld [smem:[#allocation0]]
  $region49: #{forward_pallas.3} parent=0
    _
  %s8 = ssub.s32 1, %s6
  %s9 = scalar_select 0, %s8, %s6
  %s11 = sshll.u32 %s0, 4
  %s12 = int_to_ptr.vmem [resolvable:$true] %s11
  %14 = dma.vmem_to_smem %s12, 16, [#allocation3], [#allocation2]
  %16 = dma.done [#allocation2], 16
  %17 = sfence
  loop: start=0, step=1, limit=4
  $region2: #{forward_pallas.3} parent=0 // loop_pre_header
    _
  $region3: #{forward_pallas.3} parent=0 // loop_header
    %s19 = sphi 0, %s23
    %p20 = scmp.ge.s32.totalorder %s19, 4
    %s29 = sphi 0, %s31
    %s32 = sphi 0, %s29
    %s33 = sphi 0, %s32
    %s49 = sphi 0, %s33
    %s57 = sphi 0, %s59
    %s60 = sphi 0, %s57
    %s61 = sphi 0, %s60
    %s77 = sphi 0, %s61
    %s81 = sphi 0, %s81
    %s83 = sphi 0, %s81
    %s84 = sphi 0, %s83
    %s98 = sphi 0, %s84
    %s102 = sphi 0, %s102
    %s104 = sphi 0, %s102
    %s105 = sphi 0, %s104
    %s119 = sphi 0, %s105
    %s125 = sphi 0, %s127
    %s128 = sphi 0, %s125
    %s129 = sphi 0, %s128
    %s145 = sphi 0, %s129
  $region4: #{forward_pallas.3} parent=0 // loop_header_branch
    %22 = sbr.rel (%p20) target = $region8
  $region5: #{forward_pallas.3} parent=0 // loop_body
    %s24 = ssub.s32 %s19, 1
    %s25 = ssub.s32 %s19, 2
    %s26 = sadd.s32 %s19, 1
    %s27 = ssub.s32 %s19, %s26
    %p28 = scmp.eq.s32.totalorder %s27, 0
    %s30 = sadd.s32 %s29, 1
    %s31 = scalar_select %p28, %s29, %s30
    %p34 = pneg %p28
    %p35 = scmp.eq.s32.totalorder %s19, 1
    %p36 = por %p34, %p35
    %p37 = scmp.ne.s32.totalorder %s29, %s32
    %p38 = scmp.eq.s32.totalorder %s19, 0
    %p39 = por %p37, %p38
    %p40 = scmp.ne.s32.totalorder %s29, %s32
    %p41 = scmp.eq.s32.totalorder %s24, 1
    %p42 = por %p40, %p41
    %p43 = scmp.ne.s32.totalorder %s32, %s33
    %p44 = scmp.eq.s32.totalorder %s24, 0
    %p45 = por %p43, %p44
    %p46 = scmp.ne.s32.totalorder %s32, %s33
    %p47 = scmp.eq.s32.totalorder %s25, 1
    %p48 = por %p46, %p47
    %p50 = scmp.ne.s32.totalorder %s33, %s49
    %p51 = scmp.eq.s32.totalorder %s25, 0
    %p52 = por %p50, %p51
    %s53 = sld [smem:[#allocation3 + %s19]]
    %s54 = sld [smem:[#allocation3 + %s26]]
    %s55 = ssub.s32 %s53, %s54
    %p56 = scmp.eq.s32.totalorder %s55, 0
    %s58 = sadd.s32 %s57, 1
    %s59 = scalar_select %p56, %s57, %s58
    %p62 = pneg %p56
    %p63 = scmp.eq.s32.totalorder %s19, 1
    %p64 = por %p62, %p63
    %p65 = scmp.ne.s32.totalorder %s57, %s60
    %p66 = scmp.eq.s32.totalorder %s19, 0
    %p67 = por %p65, %p66
    %p68 = scmp.ne.s32.totalorder %s57, %s60
    %p69 = scmp.eq.s32.totalorder %s24, 1
    %p70 = por %p68, %p69
    %p71 = scmp.ne.s32.totalorder %s60, %s61
    %p72 = scmp.eq.s32.totalorder %s24, 0
    %p73 = por %p71, %p72
    %p74 = scmp.ne.s32.totalorder %s60, %s61
    %p75 = scmp.eq.s32.totalorder %s25, 1
    %p76 = por %p74, %p75
    %p78 = scmp.ne.s32.totalorder %s61, %s77
    %p79 = scmp.eq.s32.totalorder %s25, 0
    %p80 = por %p78, %p79
    %s82 = sadd.s32 %s81, 1
    %p85 = scmp.eq.s32.totalorder %s19, 1
    %p86 = scmp.ne.s32.totalorder %s81, %s83
    %p87 = scmp.eq.s32.totalorder %s19, 0
    %p88 = por %p86, %p87
    %p89 = scmp.ne.s32.totalorder %s81, %s83
    %p90 = scmp.eq.s32.totalorder %s24, 1
    %p91 = por %p89, %p90
    %p92 = scmp.ne.s32.totalorder %s83, %s84
    %p93 = scmp.eq.s32.totalorder %s24, 0
    %p94 = por %p92, %p93
    %p95 = scmp.ne.s32.totalorder %s83, %s84
    %p96 = scmp.eq.s32.totalorder %s25, 1
    %p97 = por %p95, %p96
    %p99 = scmp.ne.s32.totalorder %s84, %s98
    %p100 = scmp.eq.s32.totalorder %s25, 0
    %p101 = por %p99, %p100
    %s103 = sadd.s32 %s102, 1
    %p106 = scmp.eq.s32.totalorder %s19, 1
    %p107 = scmp.ne.s32.totalorder %s102, %s104
    %p108 = scmp.eq.s32.totalorder %s19, 0
    %p109 = por %p107, %p108
    %p110 = scmp.ne.s32.totalorder %s102, %s104
    %p111 = scmp.eq.s32.totalorder %s24, 1
    %p112 = por %p110, %p111
    %p113 = scmp.ne.s32.totalorder %s104, %s105
    %p114 = scmp.eq.s32.totalorder %s24, 0
    %p115 = por %p113, %p114
    %p116 = scmp.ne.s32.totalorder %s104, %s105
    %p117 = scmp.eq.s32.totalorder %s25, 1
    %p118 = por %p116, %p117
    %p120 = scmp.ne.s32.totalorder %s105, %s119
    %p121 = scmp.eq.s32.totalorder %s25, 0
    %p122 = por %p120, %p121
    %s123 = ssub.s32 %s19, %s26
    %p124 = scmp.eq.s32.totalorder %s123, 0
    %s126 = sadd.s32 %s125, 1
    %s127 = scalar_select %p124, %s125, %s126
    %p130 = pneg %p124
    %p131 = scmp.eq.s32.totalorder %s19, 1
    %p132 = por %p130, %p131
    %p133 = scmp.ne.s32.totalorder %s125, %s128
    %p134 = scmp.eq.s32.totalorder %s19, 0
    %p135 = por %p133, %p134
    %p136 = scmp.ne.s32.totalorder %s125, %s128
    %p137 = scmp.eq.s32.totalorder %s24, 1
    %p138 = por %p136, %p137
    %p139 = scmp.ne.s32.totalorder %s128, %s129
    %p140 = scmp.eq.s32.totalorder %s24, 0
    %p141 = por %p139, %p140
    %p142 = scmp.ne.s32.totalorder %s128, %s129
    %p143 = scmp.eq.s32.totalorder %s25, 1
    %p144 = por %p142, %p143
    %p146 = scmp.ne.s32.totalorder %s129, %s145
    %p147 = scmp.eq.s32.totalorder %s25, 0
    %p148 = por %p146, %p147
    %p149 = scmp.le.s32.totalorder 1, %s19
    %p150 = scmp.lt.s32.totalorder %s19, 3
    %p151 = pnand %p149, %p150
    %p152 = pneg %p151
    // Predicated region
    $region9: #{forward_pallas.3} parent=5 // pred_check
      _
    $region10: #{forward_pallas.3} parent=5 // pred_check_branch
      %154 = sbr.rel (%p151) target = $region12
    $region11: #{forward_pallas.3} parent=5 // pred_region
      %s155 = ssub.s32 %s19, 1
      // Predicated region
      $region13: #{forward_pallas.3} parent=11 // pred_check
        %p156 = pneg %p94
      $region14: #{forward_pallas.3} parent=11 // pred_check_branch
        %158 = sbr.rel (%p156) target = $region16
      $region15: #{forward_pallas.3} parent=11 // pred_region
        _
      $region16: #{forward_pallas.3} parent=11 // pred_fallthru
        _
      // Predicated region
      $region17: #{forward_pallas.3} parent=11 // pred_check
        %p159 = pneg %p115
      $region18: #{forward_pallas.3} parent=11 // pred_check_branch
        %161 = sbr.rel (%p159) target = $region20
      $region19: #{forward_pallas.3} parent=11 // pred_region
        _
      $region20: #{forward_pallas.3} parent=11 // pred_fallthru
        _
    $region12: #{forward_pallas.3} parent=5 // pred_fallthru
      _
    %p162 = scmp.lt.s32.totalorder %s19, 2
    // Predicated region
    $region21: #{forward_pallas.3} parent=5 // pred_check
      %p163 = pneg %p162
    $region22: #{forward_pallas.3} parent=5 // pred_check_branch
      %165 = sbr.rel (%p163) target = $region24
    $region23: #{forward_pallas.3} parent=5 // pred_region
      // Predicated region
      $region25: #{forward_pallas.3} parent=23 // pred_check
        %p166 = pneg %p39
      $region26: #{forward_pallas.3} parent=23 // pred_check_branch
        %168 = sbr.rel (%p166) target = $region28
      $region27: #{forward_pallas.3} parent=23 // pred_region
        %s169 = smul.u32 64, %s19
        %p170 = scmp.lt.s32.totalorder %s169, 127
        %s171 = scalar_select %p170, %s169, 127
        %s172 = smul.addr %s171, 4
        %s173 = scalar_lea.vmem %s1, %s172
        %s174 = smul.u32 64, %s19
      $region28: #{forward_pallas.3} parent=23 // pred_fallthru
        _
      // Predicated region
      $region29: #{forward_pallas.3} parent=23 // pred_check
        %p175 = pneg %p67
      $region30: #{forward_pallas.3} parent=23 // pred_check_branch
        %177 = sbr.rel (%p175) target = $region32
      $region31: #{forward_pallas.3} parent=23 // pred_region
        %s178 = sld [smem:[#allocation3 + %s19]]
        %p179 = scmp.lt.s32.totalorder %s178, 1
        %s180 = scalar_select %p179, %s178, 1
        %s181 = smul.addr %s180, 5
        %s182 = smul.addr %s181, 4
        %s183 = scalar_lea.vmem %s2, %s182
        %s184 = sld [smem:[#allocation3 + %s19]]
      $region32: #{forward_pallas.3} parent=23 // pred_fallthru
        _
    $region24: #{forward_pallas.3} parent=5 // pred_fallthru
      _
    %p185 = scmp.le.s32.totalorder 1, %s19
    %p186 = scmp.lt.s32.totalorder %s19, 3
    %p187 = pnand %p185, %p186
    %p188 = pneg %p187
    // Predicated region
    $region33: #{forward_pallas.3} parent=5 // pred_check
      _
    $region34: #{forward_pallas.3} parent=5 // pred_check_branch
      %190 = sbr.rel (%p187) target = $region36
    $region35: #{forward_pallas.3} parent=5 // pred_region
      %s191 = ssub.s32 %s19, 1
      %s192 = smul.u32 64, %s24
      %p193 = scmp.lt.s32.totalorder %s192, 127
      %s194 = scalar_select %p193, %s192, 127
      %s195 = smul.addr %s194, 4
      %s196 = scalar_lea.vmem %s1, %s195
      %p197 = pneg %p45
      %p198 = pneg %p42
      %s199 = sld [smem:[#allocation3 + %s24]]
      %p200 = scmp.lt.s32.totalorder %s199, 1
      %s201 = scalar_select %p200, %s199, 1
      %s202 = smul.addr %s201, 5
      %s203 = smul.addr %s202, 4
      %s204 = scalar_lea.vmem %s2, %s203
      %p205 = pneg %p73
      %p206 = pneg %p70
      %p207 = pneg %p94
      %p208 = pneg %p91
      %p209 = pneg %p115
      %p210 = pneg %p112
      %p211 = pneg %p141
      %p212 = pneg %p138
      %s213 = smul.u32 64, %s24
      %p214 = scmp.lt.s32.totalorder %s213, 127
      %s215 = scalar_select %p214, %s213, 127
      %s216 = smul.addr %s215, 4
      %s217 = scalar_lea.vmem %s5, %s216
      %s218 = smul.u32 64, %s24
      %p219 = scmp.lt.s32.totalorder %s218, 127
      %s220 = scalar_select %p219, %s218, 127
      %s221 = smul.addr %s220, 4
      %s222 = scalar_lea.vmem %s1, %s221
      %s223 = smul.u32 64, %s24
      %s224 = sld [smem:[#allocation3 + %s24]]
      %p225 = scmp.lt.s32.totalorder %s224, 1
      %s226 = scalar_select %p225, %s224, 1
      %s227 = smul.addr %s226, 5
      %s228 = smul.addr %s227, 4
      %s229 = scalar_lea.vmem %s2, %s228
      %s230 = sld [smem:[#allocation3 + %s24]]
      %s231 = smul.u32 64, %s24
      %p232 = scmp.lt.s32.totalorder %s231, 127
      %s233 = scalar_select %p232, %s231, 127
      %s234 = smul.addr %s233, 4
      %s235 = scalar_lea.vmem %s5, %s234
      %s236 = smul.u32 64, %s24
      %v238 = vld [vmem:[%s222] sm:$0xf]
      %v239 = vld [vmem:[%s222 + $0x4] sm:$0xf]
      %v240 = vld [vmem:[%s222 + $0x8] sm:$0xf]
      %v241 = vld [vmem:[%s222 + $0xc] sm:$0xf]
      %v242 = vld [vmem:[%s222 + $0x10] sm:$0xf]
      %v243 = vld [vmem:[%s222 + $0x14] sm:$0xf]
      %v244 = vld [vmem:[%s222 + $0x18] sm:$0xf]
      %v245 = vld [vmem:[%s222 + $0x1c] sm:$0xf]
      %v246 = vld [vmem:[%s222 + $0x20] sm:$0xf]
      %v247 = vld [vmem:[%s222 + $0x24] sm:$0xf]
      %v248 = vld [vmem:[%s222 + $0x28] sm:$0xf]
      %v249 = vld [vmem:[%s222 + $0x2c] sm:$0xf]
      %v250 = vld [vmem:[%s222 + $0x30] sm:$0xf]
      %v251 = vld [vmem:[%s222 + $0x34] sm:$0xf]
      %v252 = vld [vmem:[%s222 + $0x38] sm:$0xf]
      %v253 = vld [vmem:[%s222 + $0x3c] sm:$0xf]
      %v254 = vld [vmem:[%s222 + $0x40] sm:$0xf]
      %v255 = vld [vmem:[%s222 + $0x44] sm:$0xf]
      %v256 = vld [vmem:[%s222 + $0x48] sm:$0xf]
      %v257 = vld [vmem:[%s222 + $0x4c] sm:$0xf]
      %v258 = vld [vmem:[%s222 + $0x50] sm:$0xf]
      %v259 = vld [vmem:[%s222 + $0x54] sm:$0xf]
      %v260 = vld [vmem:[%s222 + $0x58] sm:$0xf]
      %v261 = vld [vmem:[%s222 + $0x5c] sm:$0xf]
      %v262 = vld [vmem:[%s222 + $0x60] sm:$0xf]
      %v263 = vld [vmem:[%s222 + $0x64] sm:$0xf]
      %v264 = vld [vmem:[%s222 + $0x68] sm:$0xf]
      %v265 = vld [vmem:[%s222 + $0x6c] sm:$0xf]
      %v266 = vld [vmem:[%s222 + $0x70] sm:$0xf]
      %v267 = vld [vmem:[%s222 + $0x74] sm:$0xf]
      %v268 = vld [vmem:[%s222 + $0x78] sm:$0xf]
      %v269 = vld [vmem:[%s222 + $0x7c] sm:$0xf]
      %v270 = vld [vmem:[%s222 + $0x80] sm:$0xf]
      %v271 = vld [vmem:[%s222 + $0x84] sm:$0xf]
      %v272 = vld [vmem:[%s222 + $0x88] sm:$0xf]
      %v273 = vld [vmem:[%s222 + $0x8c] sm:$0xf]
      %v274 = vld [vmem:[%s222 + $0x90] sm:$0xf]
      %v275 = vld [vmem:[%s222 + $0x94] sm:$0xf]
      %v276 = vld [vmem:[%s222 + $0x98] sm:$0xf]
      %v277 = vld [vmem:[%s222 + $0x9c] sm:$0xf]
      %v278 = vld [vmem:[%s222 + $0xa0] sm:$0xf]
      %v279 = vld [vmem:[%s222 + $0xa4] sm:$0xf]
      %v280 = vld [vmem:[%s222 + $0xa8] sm:$0xf]
      %v281 = vld [vmem:[%s222 + $0xac] sm:$0xf]
      %v282 = vld [vmem:[%s222 + $0xb0] sm:$0xf]
      %v283 = vld [vmem:[%s222 + $0xb4] sm:$0xf]
      %v284 = vld [vmem:[%s222 + $0xb8] sm:$0xf]
      %v285 = vld [vmem:[%s222 + $0xbc] sm:$0xf]
      %v286 = vld [vmem:[%s222 + $0xc0] sm:$0xf]
      %v287 = vld [vmem:[%s222 + $0xc4] sm:$0xf]
      %v288 = vld [vmem:[%s222 + $0xc8] sm:$0xf]
      %v289 = vld [vmem:[%s222 + $0xcc] sm:$0xf]
      %v290 = vld [vmem:[%s222 + $0xd0] sm:$0xf]
      %v291 = vld [vmem:[%s222 + $0xd4] sm:$0xf]
      %v292 = vld [vmem:[%s222 + $0xd8] sm:$0xf]
      %v293 = vld [vmem:[%s222 + $0xdc] sm:$0xf]
      %v294 = vld [vmem:[%s222 + $0xe0] sm:$0xf]
      %v295 = vld [vmem:[%s222 + $0xe4] sm:$0xf]
      %v296 = vld [vmem:[%s222 + $0xe8] sm:$0xf]
      %v297 = vld [vmem:[%s222 + $0xec] sm:$0xf]
      %v298 = vld [vmem:[%s222 + $0xf0] sm:$0xf]
      %v299 = vld [vmem:[%s222 + $0xf4] sm:$0xf]
      %v300 = vld [vmem:[%s222 + $0xf8] sm:$0xf]
      %v301 = vld [vmem:[%s222 + $0xfc] sm:$0xf]
      %v302 = vld [vmem:[%s229] sm:$0xf]
      %v303 = vld [vmem:[%s229 + $0x4] sm:$0xf]
      %v304 = vld [vmem:[%s229 + $0x8] sm:$0xf]
      %v305 = vld [vmem:[%s229 + $0xc] sm:$0xf]
      %v306 = vld [vmem:[%s229 + $0x10] sm:$0x3]
      %v371 = vunpack.c.l.b16 %v238
      %v372 = vunpack.c.l.b16 %v239
      %v373 = vunpack.c.l.b16 %v240
      %v374 = vunpack.c.l.b16 %v241
      %v375 = vunpack.c.l.b16 %v242
      %v376 = vunpack.c.l.b16 %v243
      %v377 = vunpack.c.l.b16 %v244
      %v378 = vunpack.c.l.b16 %v245
      %v379 = vunpack.c.l.b16 %v246
      %v380 = vunpack.c.l.b16 %v247
      %v381 = vunpack.c.l.b16 %v248
      %v382 = vunpack.c.l.b16 %v249
      %v383 = vunpack.c.l.b16 %v250
      %v384 = vunpack.c.l.b16 %v251
      %v385 = vunpack.c.l.b16 %v252
      %v386 = vunpack.c.l.b16 %v253
      %v387 = vunpack.c.l.b16 %v254
      %v388 = vunpack.c.l.b16 %v255
      %v389 = vunpack.c.l.b16 %v256
      %v390 = vunpack.c.l.b16 %v257
      %v391 = vunpack.c.l.b16 %v258
      %v392 = vunpack.c.l.b16 %v259
      %v393 = vunpack.c.l.b16 %v260
      %v394 = vunpack.c.l.b16 %v261
      %v395 = vunpack.c.l.b16 %v262
      %v396 = vunpack.c.l.b16 %v263
      %v397 = vunpack.c.l.b16 %v264
      %v398 = vunpack.c.l.b16 %v265
      %v399 = vunpack.c.l.b16 %v266
      %v400 = vunpack.c.l.b16 %v267
      %v401 = vunpack.c.l.b16 %v268
      %v402 = vunpack.c.l.b16 %v269
      %v403 = vunpack.c.l.b16 %v270
      %v404 = vunpack.c.l.b16 %v271
      %v405 = vunpack.c.l.b16 %v272
      %v406 = vunpack.c.l.b16 %v273
      %v407 = vunpack.c.l.b16 %v274
      %v408 = vunpack.c.l.b16 %v275
      %v409 = vunpack.c.l.b16 %v276
      %v410 = vunpack.c.l.b16 %v277
      %v411 = vunpack.c.l.b16 %v278
      %v412 = vunpack.c.l.b16 %v279
      %v413 = vunpack.c.l.b16 %v280
      %v414 = vunpack.c.l.b16 %v281
      %v415 = vunpack.c.l.b16 %v282
      %v416 = vunpack.c.l.b16 %v283
      %v417 = vunpack.c.l.b16 %v284
      %v418 = vunpack.c.l.b16 %v285
      %v419 = vunpack.c.l.b16 %v286
      %v420 = vunpack.c.l.b16 %v287
      %v421 = vunpack.c.l.b16 %v288
      %v422 = vunpack.c.l.b16 %v289
      %v423 = vunpack.c.l.b16 %v290
      %v424 = vunpack.c.l.b16 %v291
      %v425 = vunpack.c.l.b16 %v292
      %v426 = vunpack.c.l.b16 %v293
      %v427 = vunpack.c.l.b16 %v294
      %v428 = vunpack.c.l.b16 %v295
      %v429 = vunpack.c.l.b16 %v296
      %v430 = vunpack.c.l.b16 %v297
      %v431 = vunpack.c.l.b16 %v298
      %v432 = vunpack.c.l.b16 %v299
      %v433 = vunpack.c.l.b16 %v300
      %v434 = vunpack.c.l.b16 %v301
      %v435 = vpack.c.b16 %v372, %v371
      %v436 = vpack.c.b16 %v374, %v373
      %v437 = vpack.c.b16 %v376, %v375
      %v438 = vpack.c.b16 %v378, %v377
      %v439 = vpack.c.b16 %v380, %v379
      %v440 = vpack.c.b16 %v382, %v381
      %v441 = vpack.c.b16 %v384, %v383
      %v442 = vpack.c.b16 %v386, %v385
      %v443 = vpack.c.b16 %v388, %v387
      %v444 = vpack.c.b16 %v390, %v389
      %v445 = vpack.c.b16 %v392, %v391
      %v446 = vpack.c.b16 %v394, %v393
      %v447 = vpack.c.b16 %v396, %v395
      %v448 = vpack.c.b16 %v398, %v397
      %v449 = vpack.c.b16 %v400, %v399
      %v450 = vpack.c.b16 %v402, %v401
      %v451 = vpack.c.b16 %v404, %v403
      %v452 = vpack.c.b16 %v406, %v405
      %v453 = vpack.c.b16 %v408, %v407
      %v454 = vpack.c.b16 %v410, %v409
      %v455 = vpack.c.b16 %v412, %v411
      %v456 = vpack.c.b16 %v414, %v413
      %v457 = vpack.c.b16 %v416, %v415
      %v458 = vpack.c.b16 %v418, %v417
      %v459 = vpack.c.b16 %v420, %v419
      %v460 = vpack.c.b16 %v422, %v421
      %v461 = vpack.c.b16 %v424, %v423
      %v462 = vpack.c.b16 %v426, %v425
      %v463 = vpack.c.b16 %v428, %v427
      %v464 = vpack.c.b16 %v430, %v429
      %v465 = vpack.c.b16 %v432, %v431
      %v466 = vpack.c.b16 %v434, %v433
      %v472 = vunpack.c.l.b16 %v302
      %v473 = vunpack.c.l.b16 %v303
      %v474 = vunpack.c.l.b16 %v304
      %v475 = vunpack.c.l.b16 %v305
      %v476 = vunpack.c.l.b16 %v306
      %v477 = vpack.c.b16 %v473, %v472
      %v478 = vpack.c.b16 %v475, %v474
      %v479 = vpack.c.b16 %v476, %v476
      %vm482 = vcmask 293888
      %v484 = vsel %vm482, %v435, 0
      %v487 = vsel %vm482, %v436, 0
      %v490 = vsel %vm482, %v437, 0
      %v493 = vsel %vm482, %v438, 0
      %v496 = vsel %vm482, %v439, 0
      %v499 = vsel %vm482, %v440, 0
      %v502 = vsel %vm482, %v441, 0
      %v505 = vsel %vm482, %v442, 0
      %v508 = vsel %vm482, %v443, 0
      %v511 = vsel %vm482, %v444, 0
      %v514 = vsel %vm482, %v445, 0
      %v517 = vsel %vm482, %v446, 0
      %v520 = vsel %vm482, %v447, 0
      %v523 = vsel %vm482, %v448, 0
      %v526 = vsel %vm482, %v449, 0
      %v529 = vsel %vm482, %v450, 0
      %v532 = vsel %vm482, %v451, 0
      %v535 = vsel %vm482, %v452, 0
      %v538 = vsel %vm482, %v453, 0
      %v541 = vsel %vm482, %v454, 0
      %v544 = vsel %vm482, %v455, 0
      %v547 = vsel %vm482, %v456, 0
      %v550 = vsel %vm482, %v457, 0
      %v553 = vsel %vm482, %v458, 0
      %v556 = vsel %vm482, %v459, 0
      %v559 = vsel %vm482, %v460, 0
      %v562 = vsel %vm482, %v461, 0
      %v565 = vsel %vm482, %v462, 0
      %v568 = vsel %vm482, %v463, 0
      %v571 = vsel %vm482, %v464, 0
      %v574 = vsel %vm482, %v465, 0
      %v577 = vsel %vm482, %v466, 0
      %vm579 = vcmask 1041408
      %v581 = vsel %vm579, %v479, 0
      %583 = vmatpush.bf16.msra.mxu0 0
      %584 = vmatpush.bf16.msra.mxu0 0
      %585 = vmatpush.bf16.msra.mxu0 0
      %586 = vmatpush.bf16.msra.mxu0 0
      %587 = vmatpush.bf16.msra.mxu0 0
      %588 = vmatpush.bf16.msra.mxu0 %v581
      %589 = vmatpush.bf16.msra.mxu0 %v478
      %590 = vmatpush.bf16.msra.mxu0 %v477
      %591 = vmatmul.bf16.gmra.mxu0 %v484
      %v592 = vpop.f32.mrf.mxu0
      %v593 = vadd.f32 0.0, %v592
      %v594 = vpop.f32.mrf.mxu0
      %v595 = vadd.f32 0.0, %v594
      %596 = vmatmul.bf16.gmra.mxu0 %v487
      %v597 = vpop.f32.mrf.mxu0
      %v598 = vadd.f32 0.0, %v597
      %v599 = vpop.f32.mrf.mxu0
      %v600 = vadd.f32 0.0, %v599
      %601 = vmatmul.bf16.gmra.mxu0 %v490
      %v602 = vpop.f32.mrf.mxu0
      %v603 = vadd.f32 0.0, %v602
      %v604 = vpop.f32.mrf.mxu0
      %v605 = vadd.f32 0.0, %v604
      %606 = vmatmul.bf16.gmra.mxu0 %v493
      %v607 = vpop.f32.mrf.mxu0
      %v608 = vadd.f32 0.0, %v607
      %v609 = vpop.f32.mrf.mxu0
      %v610 = vadd.f32 0.0, %v609
      %611 = vmatmul.bf16.gmra.mxu0 %v496
      %v612 = vpop.f32.mrf.mxu0
      %v613 = vadd.f32 0.0, %v612
      %v614 = vpop.f32.mrf.mxu0
      %v615 = vadd.f32 0.0, %v614
      %616 = vmatmul.bf16.gmra.mxu0 %v499
      %v617 = vpop.f32.mrf.mxu0
      %v618 = vadd.f32 0.0, %v617
      %v619 = vpop.f32.mrf.mxu0
      %v620 = vadd.f32 0.0, %v619
      %621 = vmatmul.bf16.gmra.mxu0 %v502
      %v622 = vpop.f32.mrf.mxu0
      %v623 = vadd.f32 0.0, %v622
      %v624 = vpop.f32.mrf.mxu0
      %v625 = vadd.f32 0.0, %v624
      %626 = vmatmul.bf16.gmra.mxu0 %v505
      %v627 = vpop.f32.mrf.mxu0
      %v628 = vadd.f32 0.0, %v627
      %v629 = vpop.f32.mrf.mxu0
      %v630 = vadd.f32 0.0, %v629
      %631 = vmatmul.bf16.gmra.mxu0 %v508
      %v632 = vpop.f32.mrf.mxu0
      %v633 = vadd.f32 0.0, %v632
      %v634 = vpop.f32.mrf.mxu0
      %v635 = vadd.f32 0.0, %v634
      %636 = vmatmul.bf16.gmra.mxu0 %v511
      %v637 = vpop.f32.mrf.mxu0
      %v638 = vadd.f32 0.0, %v637
      %v639 = vpop.f32.mrf.mxu0
      %v640 = vadd.f32 0.0, %v639
      %641 = vmatmul.bf16.gmra.mxu0 %v514
      %v642 = vpop.f32.mrf.mxu0
      %v643 = vadd.f32 0.0, %v642
      %v644 = vpop.f32.mrf.mxu0
      %v645 = vadd.f32 0.0, %v644
      %646 = vmatmul.bf16.gmra.mxu0 %v517
      %v647 = vpop.f32.mrf.mxu0
      %v648 = vadd.f32 0.0, %v647
      %v649 = vpop.f32.mrf.mxu0
      %v650 = vadd.f32 0.0, %v649
      %651 = vmatmul.bf16.gmra.mxu0 %v520
      %v652 = vpop.f32.mrf.mxu0
      %v653 = vadd.f32 0.0, %v652
      %v654 = vpop.f32.mrf.mxu0
      %v655 = vadd.f32 0.0, %v654
      %656 = vmatmul.bf16.gmra.mxu0 %v523
      %v657 = vpop.f32.mrf.mxu0
      %v658 = vadd.f32 0.0, %v657
      %v659 = vpop.f32.mrf.mxu0
      %v660 = vadd.f32 0.0, %v659
      %661 = vmatmul.bf16.gmra.mxu0 %v526
      %v662 = vpop.f32.mrf.mxu0
      %v663 = vadd.f32 0.0, %v662
      %v664 = vpop.f32.mrf.mxu0
      %v665 = vadd.f32 0.0, %v664
      %666 = vmatmul.bf16.gmra.mxu0 %v529
      %v667 = vpop.f32.mrf.mxu0
      %v668 = vadd.f32 0.0, %v667
      %v669 = vpop.f32.mrf.mxu0
      %v670 = vadd.f32 0.0, %v669
      %671 = vmatmul.bf16.gmra.mxu0 %v532
      %v672 = vpop.f32.mrf.mxu0
      %v673 = vadd.f32 0.0, %v672
      %v674 = vpop.f32.mrf.mxu0
      %v675 = vadd.f32 0.0, %v674
      %676 = vmatmul.bf16.gmra.mxu0 %v535
      %v677 = vpop.f32.mrf.mxu0
      %v678 = vadd.f32 0.0, %v677
      %v679 = vpop.f32.mrf.mxu0
      %v680 = vadd.f32 0.0, %v679
      %681 = vmatmul.bf16.gmra.mxu0 %v538
      %v682 = vpop.f32.mrf.mxu0
      %v683 = vadd.f32 0.0, %v682
      %v684 = vpop.f32.mrf.mxu0
      %v685 = vadd.f32 0.0, %v684
      %686 = vmatmul.bf16.gmra.mxu0 %v541
      %v687 = vpop.f32.mrf.mxu0
      %v688 = vadd.f32 0.0, %v687
      %v689 = vpop.f32.mrf.mxu0
      %v690 = vadd.f32 0.0, %v689
      %691 = vmatmul.bf16.gmra.mxu0 %v544
      %v692 = vpop.f32.mrf.mxu0
      %v693 = vadd.f32 0.0, %v692
      %v694 = vpop.f32.mrf.mxu0
      %v695 = vadd.f32 0.0, %v694
      %696 = vmatmul.bf16.gmra.mxu0 %v547
      %v697 = vpop.f32.mrf.mxu0
      %v698 = vadd.f32 0.0, %v697
      %v699 = vpop.f32.mrf.mxu0
      %v700 = vadd.f32 0.0, %v699
      %701 = vmatmul.bf16.gmra.mxu0 %v550
      %v702 = vpop.f32.mrf.mxu0
      %v703 = vadd.f32 0.0, %v702
      %v704 = vpop.f32.mrf.mxu0
      %v705 = vadd.f32 0.0, %v704
      %706 = vmatmul.bf16.gmra.mxu0 %v553
      %v707 = vpop.f32.mrf.mxu0
      %v708 = vadd.f32 0.0, %v707
      %v709 = vpop.f32.mrf.mxu0
      %v710 = vadd.f32 0.0, %v709
      %711 = vmatmul.bf16.gmra.mxu0 %v556
      %v712 = vpop.f32.mrf.mxu0
      %v713 = vadd.f32 0.0, %v712
      %v714 = vpop.f32.mrf.mxu0
      %v715 = vadd.f32 0.0, %v714
      %716 = vmatmul.bf16.gmra.mxu0 %v559
      %v717 = vpop.f32.mrf.mxu0
      %v718 = vadd.f32 0.0, %v717
      %v719 = vpop.f32.mrf.mxu0
      %v720 = vadd.f32 0.0, %v719
      %721 = vmatmul.bf16.gmra.mxu0 %v562
      %v722 = vpop.f32.mrf.mxu0
      %v723 = vadd.f32 0.0, %v722
      %v724 = vpop.f32.mrf.mxu0
      %v725 = vadd.f32 0.0, %v724
      %726 = vmatmul.bf16.gmra.mxu0 %v565
      %v727 = vpop.f32.mrf.mxu0
      %v728 = vadd.f32 0.0, %v727
      %v729 = vpop.f32.mrf.mxu0
      %v730 = vadd.f32 0.0, %v729
      %731 = vmatmul.bf16.gmra.mxu0 %v568
      %v732 = vpop.f32.mrf.mxu0
      %v733 = vadd.f32 0.0, %v732
      %v734 = vpop.f32.mrf.mxu0
      %v735 = vadd.f32 0.0, %v734
      %736 = vmatmul.bf16.gmra.mxu0 %v571
      %v737 = vpop.f32.mrf.mxu0
      %v738 = vadd.f32 0.0, %v737
      %v739 = vpop.f32.mrf.mxu0
      %v740 = vadd.f32 0.0, %v739
      %741 = vmatmul.bf16.gmra.mxu0 %v574
      %v742 = vpop.f32.mrf.mxu0
      %v743 = vadd.f32 0.0, %v742
      %v744 = vpop.f32.mrf.mxu0
      %v745 = vadd.f32 0.0, %v744
      %746 = vmatmul.bf16.gmra.mxu0 %v577
      %v747 = vpop.f32.mrf.mxu0
      %v748 = vadd.f32 0.0, %v747
      %v749 = vpop.f32.mrf.mxu0
      %v750 = vadd.f32 0.0, %v749
      %751 = vdwg.mxu0
      %v752 = vld [vmem:[%s3] sm:$0x1]
      %v754 = vperm.slane %v752, 0
      %v756 = vmul.f32 %v593, %v754
      %v757 = vmul.f32 %v595, %v754
      %v758 = vmul.f32 %v598, %v754
      %v759 = vmul.f32 %v600, %v754
      %v760 = vmul.f32 %v603, %v754
      %v761 = vmul.f32 %v605, %v754
      %v762 = vmul.f32 %v608, %v754
      %v763 = vmul.f32 %v610, %v754
      %v764 = vmul.f32 %v613, %v754
      %v765 = vmul.f32 %v615, %v754
      %v766 = vmul.f32 %v618, %v754
      %v767 = vmul.f32 %v620, %v754
      %v768 = vmul.f32 %v623, %v754
      %v769 = vmul.f32 %v625, %v754
      %v770 = vmul.f32 %v628, %v754
      %v771 = vmul.f32 %v630, %v754
      %v772 = vmul.f32 %v633, %v754
      %v773 = vmul.f32 %v635, %v754
      %v774 = vmul.f32 %v638, %v754
      %v775 = vmul.f32 %v640, %v754
      %v776 = vmul.f32 %v643, %v754
      %v777 = vmul.f32 %v645, %v754
      %v778 = vmul.f32 %v648, %v754
      %v779 = vmul.f32 %v650, %v754
      %v780 = vmul.f32 %v653, %v754
      %v781 = vmul.f32 %v655, %v754
      %v782 = vmul.f32 %v658, %v754
      %v783 = vmul.f32 %v660, %v754
      %v784 = vmul.f32 %v663, %v754
      %v785 = vmul.f32 %v665, %v754
      %v786 = vmul.f32 %v668, %v754
      %v787 = vmul.f32 %v670, %v754
      %v788 = vmul.f32 %v673, %v754
      %v789 = vmul.f32 %v675, %v754
      %v790 = vmul.f32 %v678, %v754
      %v791 = vmul.f32 %v680, %v754
      %v792 = vmul.f32 %v683, %v754
      %v793 = vmul.f32 %v685, %v754
      %v794 = vmul.f32 %v688, %v754
      %v795 = vmul.f32 %v690, %v754
      %v796 = vmul.f32 %v693, %v754
      %v797 = vmul.f32 %v695, %v754
      %v798 = vmul.f32 %v698, %v754
      %v799 = vmul.f32 %v700, %v754
      %v800 = vmul.f32 %v703, %v754
      %v801 = vmul.f32 %v705, %v754
      %v802 = vmul.f32 %v708, %v754
      %v803 = vmul.f32 %v710, %v754
      %v804 = vmul.f32 %v713, %v754
      %v805 = vmul.f32 %v715, %v754
      %v806 = vmul.f32 %v718, %v754
      %v807 = vmul.f32 %v720, %v754
      %v808 = vmul.f32 %v723, %v754
      %v809 = vmul.f32 %v725, %v754
      %v810 = vmul.f32 %v728, %v754
      %v811 = vmul.f32 %v730, %v754
      %v812 = vmul.f32 %v733, %v754
      %v813 = vmul.f32 %v735, %v754
      %v814 = vmul.f32 %v738, %v754
      %v815 = vmul.f32 %v740, %v754
      %v816 = vmul.f32 %v743, %v754
      %v817 = vmul.f32 %v745, %v754
      %v818 = vmul.f32 %v748, %v754
      %v819 = vmul.f32 %v750, %v754
      %v820 = vld [vmem:[%s4] sm:$0x1]
      %v822 = vperm.slane %v820, 0
      %v824 = vadd.f32 %v756, %v822
      %v825 = vadd.f32 %v757, %v822
      %v826 = vadd.f32 %v758, %v822
      %v827 = vadd.f32 %v759, %v822
      %v828 = vadd.f32 %v760, %v822
      %v829 = vadd.f32 %v761, %v822
      %v830 = vadd.f32 %v762, %v822
      %v831 = vadd.f32 %v763, %v822
      %v832 = vadd.f32 %v764, %v822
      %v833 = vadd.f32 %v765, %v822
      %v834 = vadd.f32 %v766, %v822
      %v835 = vadd.f32 %v767, %v822
      %v836 = vadd.f32 %v768, %v822
      %v837 = vadd.f32 %v769, %v822
      %v838 = vadd.f32 %v770, %v822
      %v839 = vadd.f32 %v771, %v822
      %v840 = vadd.f32 %v772, %v822
      %v841 = vadd.f32 %v773, %v822
      %v842 = vadd.f32 %v774, %v822
      %v843 = vadd.f32 %v775, %v822
      %v844 = vadd.f32 %v776, %v822
      %v845 = vadd.f32 %v777, %v822
      %v846 = vadd.f32 %v778, %v822
      %v847 = vadd.f32 %v779, %v822
      %v848 = vadd.f32 %v780, %v822
      %v849 = vadd.f32 %v781, %v822
      %v850 = vadd.f32 %v782, %v822
      %v851 = vadd.f32 %v783, %v822
      %v852 = vadd.f32 %v784, %v822
      %v853 = vadd.f32 %v785, %v822
      %v854 = vadd.f32 %v786, %v822
      %v855 = vadd.f32 %v787, %v822
      %v856 = vadd.f32 %v788, %v822
      %v857 = vadd.f32 %v789, %v822
      %v858 = vadd.f32 %v790, %v822
      %v859 = vadd.f32 %v791, %v822
      %v860 = vadd.f32 %v792, %v822
      %v861 = vadd.f32 %v793, %v822
      %v862 = vadd.f32 %v794, %v822
      %v863 = vadd.f32 %v795, %v822
      %v864 = vadd.f32 %v796, %v822
      %v865 = vadd.f32 %v797, %v822
      %v866 = vadd.f32 %v798, %v822
      %v867 = vadd.f32 %v799, %v822
      %v868 = vadd.f32 %v800, %v822
      %v869 = vadd.f32 %v801, %v822
      %v870 = vadd.f32 %v802, %v822
      %v871 = vadd.f32 %v803, %v822
      %v872 = vadd.f32 %v804, %v822
      %v873 = vadd.f32 %v805, %v822
      %v874 = vadd.f32 %v806, %v822
      %v875 = vadd.f32 %v807, %v822
      %v876 = vadd.f32 %v808, %v822
      %v877 = vadd.f32 %v809, %v822
      %v878 = vadd.f32 %v810, %v822
      %v879 = vadd.f32 %v811, %v822
      %v880 = vadd.f32 %v812, %v822
      %v881 = vadd.f32 %v813, %v822
      %v882 = vadd.f32 %v814, %v822
      %v883 = vadd.f32 %v815, %v822
      %v884 = vadd.f32 %v816, %v822
      %v885 = vadd.f32 %v817, %v822
      %v886 = vadd.f32 %v818, %v822
      %v887 = vadd.f32 %v819, %v822
      %v888 = vmax.f32 %v824, 0.0
      %v889 = vmax.f32 %v825, 0.0
      %v890 = vmax.f32 %v826, 0.0
      %v891 = vmax.f32 %v827, 0.0
      %v892 = vmax.f32 %v828, 0.0
      %v893 = vmax.f32 %v829, 0.0
      %v894 = vmax.f32 %v830, 0.0
      %v895 = vmax.f32 %v831, 0.0
      %v896 = vmax.f32 %v832, 0.0
      %v897 = vmax.f32 %v833, 0.0
      %v898 = vmax.f32 %v834, 0.0
      %v899 = vmax.f32 %v835, 0.0
      %v900 = vmax.f32 %v836, 0.0
      %v901 = vmax.f32 %v837, 0.0
      %v902 = vmax.f32 %v838, 0.0
      %v903 = vmax.f32 %v839, 0.0
      %v904 = vmax.f32 %v840, 0.0
      %v905 = vmax.f32 %v841, 0.0
      %v906 = vmax.f32 %v842, 0.0
      %v907 = vmax.f32 %v843, 0.0
      %v908 = vmax.f32 %v844, 0.0
      %v909 = vmax.f32 %v845, 0.0
      %v910 = vmax.f32 %v846, 0.0
      %v911 = vmax.f32 %v847, 0.0
      %v912 = vmax.f32 %v848, 0.0
      %v913 = vmax.f32 %v849, 0.0
      %v914 = vmax.f32 %v850, 0.0
      %v915 = vmax.f32 %v851, 0.0
      %v916 = vmax.f32 %v852, 0.0
      %v917 = vmax.f32 %v853, 0.0
      %v918 = vmax.f32 %v854, 0.0
      %v919 = vmax.f32 %v855, 0.0
      %v920 = vmax.f32 %v856, 0.0
      %v921 = vmax.f32 %v857, 0.0
      %v922 = vmax.f32 %v858, 0.0
      %v923 = vmax.f32 %v859, 0.0
      %v924 = vmax.f32 %v860, 0.0
      %v925 = vmax.f32 %v861, 0.0
      %v926 = vmax.f32 %v862, 0.0
      %v927 = vmax.f32 %v863, 0.0
      %v928 = vmax.f32 %v864, 0.0
      %v929 = vmax.f32 %v865, 0.0
      %v930 = vmax.f32 %v866, 0.0
      %v931 = vmax.f32 %v867, 0.0
      %v932 = vmax.f32 %v868, 0.0
      %v933 = vmax.f32 %v869, 0.0
      %v934 = vmax.f32 %v870, 0.0
      %v935 = vmax.f32 %v871, 0.0
      %v936 = vmax.f32 %v872, 0.0
      %v937 = vmax.f32 %v873, 0.0
      %v938 = vmax.f32 %v874, 0.0
      %v939 = vmax.f32 %v875, 0.0
      %v940 = vmax.f32 %v876, 0.0
      %v941 = vmax.f32 %v877, 0.0
      %v942 = vmax.f32 %v878, 0.0
      %v943 = vmax.f32 %v879, 0.0
      %v944 = vmax.f32 %v880, 0.0
      %v945 = vmax.f32 %v881, 0.0
      %v946 = vmax.f32 %v882, 0.0
      %v947 = vmax.f32 %v883, 0.0
      %v948 = vmax.f32 %v884, 0.0
      %v949 = vmax.f32 %v885, 0.0
      %v950 = vmax.f32 %v886, 0.0
      %v951 = vmax.f32 %v887, 0.0
      %v952 = vpack.c.bf16 %v888, %v888
      %v953 = vpack.c.bf16 %v889, %v889
      %v954 = vpack.c.bf16 %v890, %v890
      %v955 = vpack.c.bf16 %v891, %v891
      %v956 = vpack.c.bf16 %v892, %v892
      %v957 = vpack.c.bf16 %v893, %v893
      %v958 = vpack.c.bf16 %v894, %v894
      %v959 = vpack.c.bf16 %v895, %v895
      %v960 = vpack.c.bf16 %v896, %v896
      %v961 = vpack.c.bf16 %v897, %v897
      %v962 = vpack.c.bf16 %v898, %v898
      %v963 = vpack.c.bf16 %v899, %v899
      %v964 = vpack.c.bf16 %v900, %v900
      %v965 = vpack.c.bf16 %v901, %v901
      %v966 = vpack.c.bf16 %v902, %v902
      %v967 = vpack.c.bf16 %v903, %v903
      %v968 = vpack.c.bf16 %v904, %v904
      %v969 = vpack.c.bf16 %v905, %v905
      %v970 = vpack.c.bf16 %v906, %v906
      %v971 = vpack.c.bf16 %v907, %v907
      %v972 = vpack.c.bf16 %v908, %v908
      %v973 = vpack.c.bf16 %v909, %v909
      %v974 = vpack.c.bf16 %v910, %v910
      %v975 = vpack.c.bf16 %v911, %v911
      %v976 = vpack.c.bf16 %v912, %v912
      %v977 = vpack.c.bf16 %v913, %v913
      %v978 = vpack.c.bf16 %v914, %v914
      %v979 = vpack.c.bf16 %v915, %v915
      %v980 = vpack.c.bf16 %v916, %v916
      %v981 = vpack.c.bf16 %v917, %v917
      %v982 = vpack.c.bf16 %v918, %v918
      %v983 = vpack.c.bf16 %v919, %v919
      %v984 = vpack.c.bf16 %v920, %v920
      %v985 = vpack.c.bf16 %v921, %v921
      %v986 = vpack.c.bf16 %v922, %v922
      %v987 = vpack.c.bf16 %v923, %v923
      %v988 = vpack.c.bf16 %v924, %v924
      %v989 = vpack.c.bf16 %v925, %v925
      %v990 = vpack.c.bf16 %v926, %v926
      %v991 = vpack.c.bf16 %v927, %v927
      %v992 = vpack.c.bf16 %v928, %v928
      %v993 = vpack.c.bf16 %v929, %v929
      %v994 = vpack.c.bf16 %v930, %v930
      %v995 = vpack.c.bf16 %v931, %v931
      %v996 = vpack.c.bf16 %v932, %v932
      %v997 = vpack.c.bf16 %v933, %v933
      %v998 = vpack.c.bf16 %v934, %v934
      %v999 = vpack.c.bf16 %v935, %v935
      %v1000 = vpack.c.bf16 %v936, %v936
      %v1001 = vpack.c.bf16 %v937, %v937
      %v1002 = vpack.c.bf16 %v938, %v938
      %v1003 = vpack.c.bf16 %v939, %v939
      %v1004 = vpack.c.bf16 %v940, %v940
      %v1005 = vpack.c.bf16 %v941, %v941
      %v1006 = vpack.c.bf16 %v942, %v942
      %v1007 = vpack.c.bf16 %v943, %v943
      %v1008 = vpack.c.bf16 %v944, %v944
      %v1009 = vpack.c.bf16 %v945, %v945
      %v1010 = vpack.c.bf16 %v946, %v946
      %v1011 = vpack.c.bf16 %v947, %v947
      %v1012 = vpack.c.bf16 %v948, %v948
      %v1013 = vpack.c.bf16 %v949, %v949
      %v1014 = vpack.c.bf16 %v950, %v950
      %v1015 = vpack.c.bf16 %v951, %v951
      %1016 = vst [vmem:[%s235] sm:$0xf] %v952
      %1017 = vst [vmem:[%s235 + $0x4] sm:$0xf] %v953
      %1018 = vst [vmem:[%s235 + $0x8] sm:$0xf] %v954
      %1019 = vst [vmem:[%s235 + $0xc] sm:$0xf] %v955
      %1020 = vst [vmem:[%s235 + $0x10] sm:$0xf] %v956
      %1021 = vst [vmem:[%s235 + $0x14] sm:$0xf] %v957
      %1022 = vst [vmem:[%s235 + $0x18] sm:$0xf] %v958
      %1023 = vst [vmem:[%s235 + $0x1c] sm:$0xf] %v959
      %1024 = vst [vmem:[%s235 + $0x20] sm:$0xf] %v960
      %1025 = vst [vmem:[%s235 + $0x24] sm:$0xf] %v961
      %1026 = vst [vmem:[%s235 + $0x28] sm:$0xf] %v962
      %1027 = vst [vmem:[%s235 + $0x2c] sm:$0xf] %v963
      %1028 = vst [vmem:[%s235 + $0x30] sm:$0xf] %v964
      %1029 = vst [vmem:[%s235 + $0x34] sm:$0xf] %v965
      %1030 = vst [vmem:[%s235 + $0x38] sm:$0xf] %v966
      %1031 = vst [vmem:[%s235 + $0x3c] sm:$0xf] %v967
      %1032 = vst [vmem:[%s235 + $0x40] sm:$0xf] %v968
      %1033 = vst [vmem:[%s235 + $0x44] sm:$0xf] %v969
      %1034 = vst [vmem:[%s235 + $0x48] sm:$0xf] %v970
      %1035 = vst [vmem:[%s235 + $0x4c] sm:$0xf] %v971
      %1036 = vst [vmem:[%s235 + $0x50] sm:$0xf] %v972
      %1037 = vst [vmem:[%s235 + $0x54] sm:$0xf] %v973
      %1038 = vst [vmem:[%s235 + $0x58] sm:$0xf] %v974
      %1039 = vst [vmem:[%s235 + $0x5c] sm:$0xf] %v975
      %1040 = vst [vmem:[%s235 + $0x60] sm:$0xf] %v976
      %1041 = vst [vmem:[%s235 + $0x64] sm:$0xf] %v977
      %1042 = vst [vmem:[%s235 + $0x68] sm:$0xf] %v978
      %1043 = vst [vmem:[%s235 + $0x6c] sm:$0xf] %v979
      %1044 = vst [vmem:[%s235 + $0x70] sm:$0xf] %v980
      %1045 = vst [vmem:[%s235 + $0x74] sm:$0xf] %v981
      %1046 = vst [vmem:[%s235 + $0x78] sm:$0xf] %v982
      %1047 = vst [vmem:[%s235 + $0x7c] sm:$0xf] %v983
      %1048 = vst [vmem:[%s235 + $0x80] sm:$0xf] %v984
      %1049 = vst [vmem:[%s235 + $0x84] sm:$0xf] %v985
      %1050 = vst [vmem:[%s235 + $0x88] sm:$0xf] %v986
      %1051 = vst [vmem:[%s235 + $0x8c] sm:$0xf] %v987
      %1052 = vst [vmem:[%s235 + $0x90] sm:$0xf] %v988
      %1053 = vst [vmem:[%s235 + $0x94] sm:$0xf] %v989
      %1054 = vst [vmem:[%s235 + $0x98] sm:$0xf] %v990
      %1055 = vst [vmem:[%s235 + $0x9c] sm:$0xf] %v991
      %1056 = vst [vmem:[%s235 + $0xa0] sm:$0xf] %v992
      %1057 = vst [vmem:[%s235 + $0xa4] sm:$0xf] %v993
      %1058 = vst [vmem:[%s235 + $0xa8] sm:$0xf] %v994
      %1059 = vst [vmem:[%s235 + $0xac] sm:$0xf] %v995
      %1060 = vst [vmem:[%s235 + $0xb0] sm:$0xf] %v996
      %1061 = vst [vmem:[%s235 + $0xb4] sm:$0xf] %v997
      %1062 = vst [vmem:[%s235 + $0xb8] sm:$0xf] %v998
      %1063 = vst [vmem:[%s235 + $0xbc] sm:$0xf] %v999
      %1064 = vst [vmem:[%s235 + $0xc0] sm:$0xf] %v1000
      %1065 = vst [vmem:[%s235 + $0xc4] sm:$0xf] %v1001
      %1066 = vst [vmem:[%s235 + $0xc8] sm:$0xf] %v1002
      %1067 = vst [vmem:[%s235 + $0xcc] sm:$0xf] %v1003
      %1068 = vst [vmem:[%s235 + $0xd0] sm:$0xf] %v1004
      %1069 = vst [vmem:[%s235 + $0xd4] sm:$0xf] %v1005
      %1070 = vst [vmem:[%s235 + $0xd8] sm:$0xf] %v1006
      %1071 = vst [vmem:[%s235 + $0xdc] sm:$0xf] %v1007
      %1072 = vst [vmem:[%s235 + $0xe0] sm:$0xf] %v1008
      %1073 = vst [vmem:[%s235 + $0xe4] sm:$0xf] %v1009
      %1074 = vst [vmem:[%s235 + $0xe8] sm:$0xf] %v1010
      %1075 = vst [vmem:[%s235 + $0xec] sm:$0xf] %v1011
      %1076 = vst [vmem:[%s235 + $0xf0] sm:$0xf] %v1012
      %1077 = vst [vmem:[%s235 + $0xf4] sm:$0xf] %v1013
      %1078 = vst [vmem:[%s235 + $0xf8] sm:$0xf] %v1014
      %1079 = vst [vmem:[%s235 + $0xfc] sm:$0xf] %v1015
      %s1080 = smul.u32 64, %s24
      %p1081 = scmp.lt.s32.totalorder %s1080, 127
      %s1082 = scalar_select %p1081, %s1080, 127
      %s1083 = smul.addr %s1082, 4
      %s1084 = scalar_lea.vmem %s5, %s1083
      // Predicated region
      $region37: #{forward_pallas.3} parent=35 // pred_check
        %p1085 = pneg %p138
      $region38: #{forward_pallas.3} parent=35 // pred_check_branch
        %1087 = sbr.rel (%p1085) target = $region40
      $region39: #{forward_pallas.3} parent=35 // pred_region
        %s1088 = smul.u32 64, %s24
      $region40: #{forward_pallas.3} parent=35 // pred_fallthru
        _
    $region36: #{forward_pallas.3} parent=5 // pred_fallthru
      _
    %p1089 = scmp.le.s32.totalorder 2, %s19
    // Predicated region
    $region41: #{forward_pallas.3} parent=5 // pred_check
      %p1090 = pneg %p1089
    $region42: #{forward_pallas.3} parent=5 // pred_check_branch
      %1092 = sbr.rel (%p1090) target = $region44
    $region43: #{forward_pallas.3} parent=5 // pred_region
      %s1093 = ssub.s32 %s19, 2
      // Predicated region
      $region45: #{forward_pallas.3} parent=43 // pred_check
        %p1094 = pneg %p144
      $region46: #{forward_pallas.3} parent=43 // pred_check_branch
        %1096 = sbr.rel (%p1094) target = $region48
      $region47: #{forward_pallas.3} parent=43 // pred_region
        %s1097 = smul.u32 64, %s25
        %p1098 = scmp.lt.s32.totalorder %s1097, 127
        %s1099 = scalar_select %p1098, %s1097, 127
        %s1100 = smul.addr %s1099, 4
        %s1101 = scalar_lea.vmem %s5, %s1100
      $region48: #{forward_pallas.3} parent=43 // pred_fallthru
        _
    $region44: #{forward_pallas.3} parent=5 // pred_fallthru
      _
  $region6: #{forward_pallas.3} parent=0 // loop_footer
    %s23 = sadd.s32 1, %s19
  $region7: #{forward_pallas.3} parent=0 // loop_footer_branch
    %18 = sbr.rel target = $region3
  $region8: #{forward_pallas.3} parent=0 // loop_exit
    _

// kernel: forward_pallas.4
$region0: #{forward_pallas.4}
  #allocation0 [shape = 'u32[]', space=smem, size = 0x4, offset = 0x4, fixed_abs, tag = 'smem constant byte address 0x4 - core index']
  #allocation1 [shape = 'u32[72,128]{1,0:T(1,128)}', space=vmem, size = 0x9000, scoped, tag = 'internal scratch']
  #allocation2 [shape = 's32[1]{0}', space=sflag, size = 0x4, scoped, tag = 'scoped memory for forward_pallas.4']
  #allocation3 [shape = 'u8[512]{0}', space=smem, size = 0x200, scoped, tag = 'prefetched SMEM operand 0']
  %s0 = inlined_call_operand.vmem [shape: s32[2], index: 0, kind: input, shape index: {}]
  %s1 = inlined_call_operand.vmem [shape: bf16[256,4], index: 1, kind: input, shape index: {}]
  %s2 = inlined_call_operand.vmem [shape: bf16[2,4,128], index: 2, kind: input, shape index: {}]
  %s3 = inlined_call_operand.vmem [shape: f32[1,128], index: 3, kind: input, shape index: {}]
  %s4 = inlined_call_operand.vmem [shape: f32[1,128], index: 4, kind: input, shape index: {}]
  %s5 = inlined_call_operand.vmem [shape: bf16[256,128], index: 5, kind: output, shape index: {}]
  %s6 = sld [smem:[#allocation0]]
  $region49: #{forward_pallas.4} parent=0
    _
  %s8 = ssub.s32 1, %s6
  %s9 = scalar_select 0, %s8, %s6
  %s11 = sshll.u32 %s0, 4
  %s12 = int_to_ptr.vmem [resolvable:$true] %s11
  %14 = dma.vmem_to_smem %s12, 16, [#allocation3], [#allocation2]
  %16 = dma.done [#allocation2], 16
  %17 = sfence
  loop: start=0, step=1, limit=4
  $region2: #{forward_pallas.4} parent=0 // loop_pre_header
    _
  $region3: #{forward_pallas.4} parent=0 // loop_header
    %s19 = sphi 0, %s23
    %p20 = scmp.ge.s32.totalorder %s19, 4
    %s29 = sphi 0, %s31
    %s32 = sphi 0, %s29
    %s33 = sphi 0, %s32
    %s49 = sphi 0, %s33
    %s57 = sphi 0, %s59
    %s60 = sphi 0, %s57
    %s61 = sphi 0, %s60
    %s77 = sphi 0, %s61
    %s81 = sphi 0, %s81
    %s83 = sphi 0, %s81
    %s84 = sphi 0, %s83
    %s98 = sphi 0, %s84
    %s102 = sphi 0, %s102
    %s104 = sphi 0, %s102
    %s105 = sphi 0, %s104
    %s119 = sphi 0, %s105
    %s125 = sphi 0, %s127
    %s128 = sphi 0, %s125
    %s129 = sphi 0, %s128
    %s145 = sphi 0, %s129
  $region4: #{forward_pallas.4} parent=0 // loop_header_branch
    %22 = sbr.rel (%p20) target = $region8
  $region5: #{forward_pallas.4} parent=0 // loop_body
    %s24 = ssub.s32 %s19, 1
    %s25 = ssub.s32 %s19, 2
    %s26 = sadd.s32 %s19, 1
    %s27 = ssub.s32 %s19, %s26
    %p28 = scmp.eq.s32.totalorder %s27, 0
    %s30 = sadd.s32 %s29, 1
    %s31 = scalar_select %p28, %s29, %s30
    %p34 = pneg %p28
    %p35 = scmp.eq.s32.totalorder %s19, 1
    %p36 = por %p34, %p35
    %p37 = scmp.ne.s32.totalorder %s29, %s32
    %p38 = scmp.eq.s32.totalorder %s19, 0
    %p39 = por %p37, %p38
    %p40 = scmp.ne.s32.totalorder %s29, %s32
    %p41 = scmp.eq.s32.totalorder %s24, 1
    %p42 = por %p40, %p41
    %p43 = scmp.ne.s32.totalorder %s32, %s33
    %p44 = scmp.eq.s32.totalorder %s24, 0
    %p45 = por %p43, %p44
    %p46 = scmp.ne.s32.totalorder %s32, %s33
    %p47 = scmp.eq.s32.totalorder %s25, 1
    %p48 = por %p46, %p47
    %p50 = scmp.ne.s32.totalorder %s33, %s49
    %p51 = scmp.eq.s32.totalorder %s25, 0
    %p52 = por %p50, %p51
    %s53 = sld [smem:[#allocation3 + %s19]]
    %s54 = sld [smem:[#allocation3 + %s26]]
    %s55 = ssub.s32 %s53, %s54
    %p56 = scmp.eq.s32.totalorder %s55, 0
    %s58 = sadd.s32 %s57, 1
    %s59 = scalar_select %p56, %s57, %s58
    %p62 = pneg %p56
    %p63 = scmp.eq.s32.totalorder %s19, 1
    %p64 = por %p62, %p63
    %p65 = scmp.ne.s32.totalorder %s57, %s60
    %p66 = scmp.eq.s32.totalorder %s19, 0
    %p67 = por %p65, %p66
    %p68 = scmp.ne.s32.totalorder %s57, %s60
    %p69 = scmp.eq.s32.totalorder %s24, 1
    %p70 = por %p68, %p69
    %p71 = scmp.ne.s32.totalorder %s60, %s61
    %p72 = scmp.eq.s32.totalorder %s24, 0
    %p73 = por %p71, %p72
    %p74 = scmp.ne.s32.totalorder %s60, %s61
    %p75 = scmp.eq.s32.totalorder %s25, 1
    %p76 = por %p74, %p75
    %p78 = scmp.ne.s32.totalorder %s61, %s77
    %p79 = scmp.eq.s32.totalorder %s25, 0
    %p80 = por %p78, %p79
    %s82 = sadd.s32 %s81, 1
    %p85 = scmp.eq.s32.totalorder %s19, 1
    %p86 = scmp.ne.s32.totalorder %s81, %s83
    %p87 = scmp.eq.s32.totalorder %s19, 0
    %p88 = por %p86, %p87
    %p89 = scmp.ne.s32.totalorder %s81, %s83
    %p90 = scmp.eq.s32.totalorder %s24, 1
    %p91 = por %p89, %p90
    %p92 = scmp.ne.s32.totalorder %s83, %s84
    %p93 = scmp.eq.s32.totalorder %s24, 0
    %p94 = por %p92, %p93
    %p95 = scmp.ne.s32.totalorder %s83, %s84
    %p96 = scmp.eq.s32.totalorder %s25, 1
    %p97 = por %p95, %p96
    %p99 = scmp.ne.s32.totalorder %s84, %s98
    %p100 = scmp.eq.s32.totalorder %s25, 0
    %p101 = por %p99, %p100
    %s103 = sadd.s32 %s102, 1
    %p106 = scmp.eq.s32.totalorder %s19, 1
    %p107 = scmp.ne.s32.totalorder %s102, %s104
    %p108 = scmp.eq.s32.totalorder %s19, 0
    %p109 = por %p107, %p108
    %p110 = scmp.ne.s32.totalorder %s102, %s104
    %p111 = scmp.eq.s32.totalorder %s24, 1
    %p112 = por %p110, %p111
    %p113 = scmp.ne.s32.totalorder %s104, %s105
    %p114 = scmp.eq.s32.totalorder %s24, 0
    %p115 = por %p113, %p114
    %p116 = scmp.ne.s32.totalorder %s104, %s105
    %p117 = scmp.eq.s32.totalorder %s25, 1
    %p118 = por %p116, %p117
    %p120 = scmp.ne.s32.totalorder %s105, %s119
    %p121 = scmp.eq.s32.totalorder %s25, 0
    %p122 = por %p120, %p121
    %s123 = ssub.s32 %s19, %s26
    %p124 = scmp.eq.s32.totalorder %s123, 0
    %s126 = sadd.s32 %s125, 1
    %s127 = scalar_select %p124, %s125, %s126
    %p130 = pneg %p124
    %p131 = scmp.eq.s32.totalorder %s19, 1
    %p132 = por %p130, %p131
    %p133 = scmp.ne.s32.totalorder %s125, %s128
    %p134 = scmp.eq.s32.totalorder %s19, 0
    %p135 = por %p133, %p134
    %p136 = scmp.ne.s32.totalorder %s125, %s128
    %p137 = scmp.eq.s32.totalorder %s24, 1
    %p138 = por %p136, %p137
    %p139 = scmp.ne.s32.totalorder %s128, %s129
    %p140 = scmp.eq.s32.totalorder %s24, 0
    %p141 = por %p139, %p140
    %p142 = scmp.ne.s32.totalorder %s128, %s129
    %p143 = scmp.eq.s32.totalorder %s25, 1
    %p144 = por %p142, %p143
    %p146 = scmp.ne.s32.totalorder %s129, %s145
    %p147 = scmp.eq.s32.totalorder %s25, 0
    %p148 = por %p146, %p147
    %p149 = scmp.le.s32.totalorder 1, %s19
    %p150 = scmp.lt.s32.totalorder %s19, 3
    %p151 = pnand %p149, %p150
    %p152 = pneg %p151
    // Predicated region
    $region9: #{forward_pallas.4} parent=5 // pred_check
      _
    $region10: #{forward_pallas.4} parent=5 // pred_check_branch
      %154 = sbr.rel (%p151) target = $region12
    $region11: #{forward_pallas.4} parent=5 // pred_region
      %s155 = ssub.s32 %s19, 1
      // Predicated region
      $region13: #{forward_pallas.4} parent=11 // pred_check
        %p156 = pneg %p94
      $region14: #{forward_pallas.4} parent=11 // pred_check_branch
        %158 = sbr.rel (%p156) target = $region16
      $region15: #{forward_pallas.4} parent=11 // pred_region
        _
      $region16: #{forward_pallas.4} parent=11 // pred_fallthru
        _
      // Predicated region
      $region17: #{forward_pallas.4} parent=11 // pred_check
        %p159 = pneg %p115
      $region18: #{forward_pallas.4} parent=11 // pred_check_branch
        %161 = sbr.rel (%p159) target = $region20
      $region19: #{forward_pallas.4} parent=11 // pred_region
        _
      $region20: #{forward_pallas.4} parent=11 // pred_fallthru
        _
    $region12: #{forward_pallas.4} parent=5 // pred_fallthru
      _
    %p162 = scmp.lt.s32.totalorder %s19, 2
    // Predicated region
    $region21: #{forward_pallas.4} parent=5 // pred_check
      %p163 = pneg %p162
    $region22: #{forward_pallas.4} parent=5 // pred_check_branch
      %165 = sbr.rel (%p163) target = $region24
    $region23: #{forward_pallas.4} parent=5 // pred_region
      // Predicated region
      $region25: #{forward_pallas.4} parent=23 // pred_check
        %p166 = pneg %p39
      $region26: #{forward_pallas.4} parent=23 // pred_check_branch
        %168 = sbr.rel (%p166) target = $region28
      $region27: #{forward_pallas.4} parent=23 // pred_region
        %s169 = smul.u32 16, %s19
        %p170 = scmp.lt.s32.totalorder %s169, 31
        %s171 = scalar_select %p170, %s169, 31
        %s172 = smul.addr %s171, 4
        %s173 = scalar_lea.vmem %s1, %s172
        %s174 = smul.u32 16, %s19
      $region28: #{forward_pallas.4} parent=23 // pred_fallthru
        _
      // Predicated region
      $region29: #{forward_pallas.4} parent=23 // pred_check
        %p175 = pneg %p67
      $region30: #{forward_pallas.4} parent=23 // pred_check_branch
        %177 = sbr.rel (%p175) target = $region32
      $region31: #{forward_pallas.4} parent=23 // pred_region
        %s178 = sld [smem:[#allocation3 + %s19]]
        %p179 = scmp.lt.s32.totalorder %s178, 1
        %s180 = scalar_select %p179, %s178, 1
        %s181 = smul.addr %s180, 2
        %s182 = scalar_lea.vmem %s2, %s181
        %s183 = sld [smem:[#allocation3 + %s19]]
      $region32: #{forward_pallas.4} parent=23 // pred_fallthru
        _
    $region24: #{forward_pallas.4} parent=5 // pred_fallthru
      _
    %p184 = scmp.le.s32.totalorder 1, %s19
    %p185 = scmp.lt.s32.totalorder %s19, 3
    %p186 = pnand %p184, %p185
    %p187 = pneg %p186
    // Predicated region
    $region33: #{forward_pallas.4} parent=5 // pred_check
      _
    $region34: #{forward_pallas.4} parent=5 // pred_check_branch
      %189 = sbr.rel (%p186) target = $region36
    $region35: #{forward_pallas.4} parent=5 // pred_region
      %s190 = ssub.s32 %s19, 1
      %s191 = smul.u32 16, %s24
      %p192 = scmp.lt.s32.totalorder %s191, 31
      %s193 = scalar_select %p192, %s191, 31
      %s194 = smul.addr %s193, 4
      %s195 = scalar_lea.vmem %s1, %s194
      %p196 = pneg %p45
      %p197 = pneg %p42
      %s198 = sld [smem:[#allocation3 + %s24]]
      %p199 = scmp.lt.s32.totalorder %s198, 1
      %s200 = scalar_select %p199, %s198, 1
      %s201 = smul.addr %s200, 2
      %s202 = scalar_lea.vmem %s2, %s201
      %p203 = pneg %p73
      %p204 = pneg %p70
      %p205 = pneg %p94
      %p206 = pneg %p91
      %p207 = pneg %p115
      %p208 = pneg %p112
      %p209 = pneg %p141
      %p210 = pneg %p138
      %s211 = smul.u32 16, %s24
      %p212 = scmp.lt.s32.totalorder %s211, 31
      %s213 = scalar_select %p212, %s211, 31
      %s214 = smul.addr %s213, 4
      %s215 = scalar_lea.vmem %s5, %s214
      %s216 = smul.u32 16, %s24
      %p217 = scmp.lt.s32.totalorder %s216, 31
      %s218 = scalar_select %p217, %s216, 31
      %s219 = smul.addr %s218, 4
      %s220 = scalar_lea.vmem %s1, %s219
      %s221 = smul.u32 16, %s24
      %s222 = sld [smem:[#allocation3 + %s24]]
      %p223 = scmp.lt.s32.totalorder %s222, 1
      %s224 = scalar_select %p223, %s222, 1
      %s225 = smul.addr %s224, 2
      %s226 = scalar_lea.vmem %s2, %s225
      %s227 = sld [smem:[#allocation3 + %s24]]
      %s228 = smul.u32 16, %s24
      %p229 = scmp.lt.s32.totalorder %s228, 31
      %s230 = scalar_select %p229, %s228, 31
      %s231 = smul.addr %s230, 4
      %s232 = scalar_lea.vmem %s5, %s231
      %s233 = smul.u32 16, %s24
      %v235 = vld [vmem:[%s220] sm:$0xf]
      %v236 = vld [vmem:[%s220 + $0x4] sm:$0xf]
      %v237 = vld [vmem:[%s220 + $0x8] sm:$0xf]
      %v238 = vld [vmem:[%s220 + $0xc] sm:$0xf]
      %v239 = vld [vmem:[%s220 + $0x10] sm:$0xf]
      %v240 = vld [vmem:[%s220 + $0x14] sm:$0xf]
      %v241 = vld [vmem:[%s220 + $0x18] sm:$0xf]
      %v242 = vld [vmem:[%s220 + $0x1c] sm:$0xf]
      %v243 = vld [vmem:[%s220 + $0x20] sm:$0xf]
      %v244 = vld [vmem:[%s220 + $0x24] sm:$0xf]
      %v245 = vld [vmem:[%s220 + $0x28] sm:$0xf]
      %v246 = vld [vmem:[%s220 + $0x2c] sm:$0xf]
      %v247 = vld [vmem:[%s220 + $0x30] sm:$0xf]
      %v248 = vld [vmem:[%s220 + $0x34] sm:$0xf]
      %v249 = vld [vmem:[%s220 + $0x38] sm:$0xf]
      %v250 = vld [vmem:[%s220 + $0x3c] sm:$0xf]
      %v251 = vld [vmem:[%s226] sm:$0x3]
      %v268 = vunpack.c.l.b16 %v235
      %v269 = vunpack.c.l.b16 %v236
      %v270 = vunpack.c.l.b16 %v237
      %v271 = vunpack.c.l.b16 %v238
      %v272 = vunpack.c.l.b16 %v239
      %v273 = vunpack.c.l.b16 %v240
      %v274 = vunpack.c.l.b16 %v241
      %v275 = vunpack.c.l.b16 %v242
      %v276 = vunpack.c.l.b16 %v243
      %v277 = vunpack.c.l.b16 %v244
      %v278 = vunpack.c.l.b16 %v245
      %v279 = vunpack.c.l.b16 %v246
      %v280 = vunpack.c.l.b16 %v247
      %v281 = vunpack.c.l.b16 %v248
      %v282 = vunpack.c.l.b16 %v249
      %v283 = vunpack.c.l.b16 %v250
      %v284 = vpack.c.b16 %v269, %v268
      %v285 = vpack.c.b16 %v271, %v270
      %v286 = vpack.c.b16 %v273, %v272
      %v287 = vpack.c.b16 %v275, %v274
      %v288 = vpack.c.b16 %v277, %v276
      %v289 = vpack.c.b16 %v279, %v278
      %v290 = vpack.c.b16 %v281, %v280
      %v291 = vpack.c.b16 %v283, %v282
      %vm292 = vcmask 31744
      %v294 = vsel %vm292, %v284, 0
      %v297 = vsel %vm292, %v285, 0
      %v300 = vsel %vm292, %v286, 0
      %v303 = vsel %vm292, %v287, 0
      %v306 = vsel %vm292, %v288, 0
      %v309 = vsel %vm292, %v289, 0
      %v312 = vsel %vm292, %v290, 0
      %v315 = vsel %vm292, %v291, 0
      %vm317 = vcmask 1041408
      %v319 = vsel %vm317, %v251, 0
      %321 = vmatpush.bf16.msra.mxu0 0
      %322 = vmatpush.bf16.msra.mxu0 0
      %323 = vmatpush.bf16.msra.mxu0 0
      %324 = vmatpush.bf16.msra.mxu0 0
      %325 = vmatpush.bf16.msra.mxu0 0
      %326 = vmatpush.bf16.msra.mxu0 0
      %327 = vmatpush.bf16.msra.mxu0 0
      %328 = vmatpush.bf16.msra.mxu0 %v319
      %329 = vmatmul.bf16.gmra.mxu0 %v294
      %v330 = vpop.f32.mrf.mxu0
      %v331 = vadd.f32 0.0, %v330
      %v332 = vpop.f32.mrf.mxu0
      %v333 = vadd.f32 0.0, %v332
      %334 = vmatmul.bf16.gmra.mxu0 %v297
      %v335 = vpop.f32.mrf.mxu0
      %v336 = vadd.f32 0.0, %v335
      %v337 = vpop.f32.mrf.mxu0
      %v338 = vadd.f32 0.0, %v337
      %339 = vmatmul.bf16.gmra.mxu0 %v300
      %v340 = vpop.f32.mrf.mxu0
      %v341 = vadd.f32 0.0, %v340
      %v342 = vpop.f32.mrf.mxu0
      %v343 = vadd.f32 0.0, %v342
      %344 = vmatmul.bf16.gmra.mxu0 %v303
      %v345 = vpop.f32.mrf.mxu0
      %v346 = vadd.f32 0.0, %v345
      %v347 = vpop.f32.mrf.mxu0
      %v348 = vadd.f32 0.0, %v347
      %349 = vmatmul.bf16.gmra.mxu0 %v306
      %v350 = vpop.f32.mrf.mxu0
      %v351 = vadd.f32 0.0, %v350
      %v352 = vpop.f32.mrf.mxu0
      %v353 = vadd.f32 0.0, %v352
      %354 = vmatmul.bf16.gmra.mxu0 %v309
      %v355 = vpop.f32.mrf.mxu0
      %v356 = vadd.f32 0.0, %v355
      %v357 = vpop.f32.mrf.mxu0
      %v358 = vadd.f32 0.0, %v357
      %359 = vmatmul.bf16.gmra.mxu0 %v312
      %v360 = vpop.f32.mrf.mxu0
      %v361 = vadd.f32 0.0, %v360
      %v362 = vpop.f32.mrf.mxu0
      %v363 = vadd.f32 0.0, %v362
      %364 = vmatmul.bf16.gmra.mxu0 %v315
      %v365 = vpop.f32.mrf.mxu0
      %v366 = vadd.f32 0.0, %v365
      %v367 = vpop.f32.mrf.mxu0
      %v368 = vadd.f32 0.0, %v367
      %369 = vdwg.mxu0
      %v370 = vld [vmem:[%s3] sm:$0x1]
      %v372 = vperm.slane %v370, 0
      %v374 = vmul.f32 %v331, %v372
      %v375 = vmul.f32 %v333, %v372
      %v376 = vmul.f32 %v336, %v372
      %v377 = vmul.f32 %v338, %v372
      %v378 = vmul.f32 %v341, %v372
      %v379 = vmul.f32 %v343, %v372
      %v380 = vmul.f32 %v346, %v372
      %v381 = vmul.f32 %v348, %v372
      %v382 = vmul.f32 %v351, %v372
      %v383 = vmul.f32 %v353, %v372
      %v384 = vmul.f32 %v356, %v372
      %v385 = vmul.f32 %v358, %v372
      %v386 = vmul.f32 %v361, %v372
      %v387 = vmul.f32 %v363, %v372
      %v388 = vmul.f32 %v366, %v372
      %v389 = vmul.f32 %v368, %v372
      %v390 = vld [vmem:[%s4] sm:$0x1]
      %v392 = vperm.slane %v390, 0
      %v394 = vadd.f32 %v374, %v392
      %v395 = vadd.f32 %v375, %v392
      %v396 = vadd.f32 %v376, %v392
      %v397 = vadd.f32 %v377, %v392
      %v398 = vadd.f32 %v378, %v392
      %v399 = vadd.f32 %v379, %v392
      %v400 = vadd.f32 %v380, %v392
      %v401 = vadd.f32 %v381, %v392
      %v402 = vadd.f32 %v382, %v392
      %v403 = vadd.f32 %v383, %v392
      %v404 = vadd.f32 %v384, %v392
      %v405 = vadd.f32 %v385, %v392
      %v406 = vadd.f32 %v386, %v392
      %v407 = vadd.f32 %v387, %v392
      %v408 = vadd.f32 %v388, %v392
      %v409 = vadd.f32 %v389, %v392
      %v410 = vpack.c.bf16 %v394, %v394
      %v411 = vpack.c.bf16 %v395, %v395
      %v412 = vpack.c.bf16 %v396, %v396
      %v413 = vpack.c.bf16 %v397, %v397
      %v414 = vpack.c.bf16 %v398, %v398
      %v415 = vpack.c.bf16 %v399, %v399
      %v416 = vpack.c.bf16 %v400, %v400
      %v417 = vpack.c.bf16 %v401, %v401
      %v418 = vpack.c.bf16 %v402, %v402
      %v419 = vpack.c.bf16 %v403, %v403
      %v420 = vpack.c.bf16 %v404, %v404
      %v421 = vpack.c.bf16 %v405, %v405
      %v422 = vpack.c.bf16 %v406, %v406
      %v423 = vpack.c.bf16 %v407, %v407
      %v424 = vpack.c.bf16 %v408, %v408
      %v425 = vpack.c.bf16 %v409, %v409
      %426 = vst [vmem:[%s232] sm:$0xf] %v410
      %427 = vst [vmem:[%s232 + $0x4] sm:$0xf] %v411
      %428 = vst [vmem:[%s232 + $0x8] sm:$0xf] %v412
      %429 = vst [vmem:[%s232 + $0xc] sm:$0xf] %v413
      %430 = vst [vmem:[%s232 + $0x10] sm:$0xf] %v414
      %431 = vst [vmem:[%s232 + $0x14] sm:$0xf] %v415
      %432 = vst [vmem:[%s232 + $0x18] sm:$0xf] %v416
      %433 = vst [vmem:[%s232 + $0x1c] sm:$0xf] %v417
      %434 = vst [vmem:[%s232 + $0x20] sm:$0xf] %v418
      %435 = vst [vmem:[%s232 + $0x24] sm:$0xf] %v419
      %436 = vst [vmem:[%s232 + $0x28] sm:$0xf] %v420
      %437 = vst [vmem:[%s232 + $0x2c] sm:$0xf] %v421
      %438 = vst [vmem:[%s232 + $0x30] sm:$0xf] %v422
      %439 = vst [vmem:[%s232 + $0x34] sm:$0xf] %v423
      %440 = vst [vmem:[%s232 + $0x38] sm:$0xf] %v424
      %441 = vst [vmem:[%s232 + $0x3c] sm:$0xf] %v425
      %s442 = smul.u32 16, %s24
      %p443 = scmp.lt.s32.totalorder %s442, 31
      %s444 = scalar_select %p443, %s442, 31
      %s445 = smul.addr %s444, 4
      %s446 = scalar_lea.vmem %s5, %s445
      // Predicated region
      $region37: #{forward_pallas.4} parent=35 // pred_check
        %p447 = pneg %p138
      $region38: #{forward_pallas.4} parent=35 // pred_check_branch
        %449 = sbr.rel (%p447) target = $region40
      $region39: #{forward_pallas.4} parent=35 // pred_region
        %s450 = smul.u32 16, %s24
      $region40: #{forward_pallas.4} parent=35 // pred_fallthru
        _
    $region36: #{forward_pallas.4} parent=5 // pred_fallthru
      _
    %p451 = scmp.le.s32.totalorder 2, %s19
    // Predicated region
    $region41: #{forward_pallas.4} parent=5 // pred_check
      %p452 = pneg %p451
    $region42: #{forward_pallas.4} parent=5 // pred_check_branch
      %454 = sbr.rel (%p452) target = $region44
    $region43: #{forward_pallas.4} parent=5 // pred_region
      %s455 = ssub.s32 %s19, 2
      // Predicated region
      $region45: #{forward_pallas.4} parent=43 // pred_check
        %p456 = pneg %p144
      $region46: #{forward_pallas.4} parent=43 // pred_check_branch
        %458 = sbr.rel (%p456) target = $region48
      $region47: #{forward_pallas.4} parent=43 // pred_region
        %s459 = smul.u32 16, %s25
        %p460 = scmp.lt.s32.totalorder %s459, 31
        %s461 = scalar_select %p460, %s459, 31
        %s462 = smul.addr %s461, 4
        %s463 = scalar_lea.vmem %s5, %s462
      $region48: #{forward_pallas.4} parent=43 // pred_fallthru
        _
    $region44: #{forward_pallas.4} parent=5 // pred_fallthru
      _
  $region6: #{forward_pallas.4} parent=0 // loop_footer
    %s23 = sadd.s32 1, %s19
  $region7: #{forward_pallas.4} parent=0 // loop_footer_branch
    %18 = sbr.rel target = $region3
  $region8: #{forward_pallas.4} parent=0 // loop_exit
    _

// kernel: forward_pallas.5
$region0: #{forward_pallas.5}
  #allocation0 [shape = 'u32[]', space=smem, size = 0x4, offset = 0x4, fixed_abs, tag = 'smem constant byte address 0x4 - core index']
  #allocation1 [shape = 'u32[72,128]{1,0:T(1,128)}', space=vmem, size = 0x9000, scoped, tag = 'internal scratch']
  #allocation2 [shape = 's32[1]{0}', space=sflag, size = 0x4, scoped, tag = 'scoped memory for forward_pallas.5']
  #allocation3 [shape = 'u8[512]{0}', space=smem, size = 0x200, scoped, tag = 'prefetched SMEM operand 0']
  %s0 = inlined_call_operand.vmem [shape: s32[2], index: 0, kind: input, shape index: {}]
  %s1 = inlined_call_operand.vmem [shape: bf16[256,72], index: 1, kind: input, shape index: {}]
  %s2 = inlined_call_operand.vmem [shape: bf16[2,72,128], index: 2, kind: input, shape index: {}]
  %s3 = inlined_call_operand.vmem [shape: f32[1,128], index: 3, kind: input, shape index: {}]
  %s4 = inlined_call_operand.vmem [shape: f32[1,128], index: 4, kind: input, shape index: {}]
  %s5 = inlined_call_operand.vmem [shape: bf16[256,128], index: 5, kind: input, shape index: {}]
  %s6 = inlined_call_operand.vmem [shape: f32[256,128], index: 6, kind: output, shape index: {}]
  %s7 = sld [smem:[#allocation0]]
  $region53: #{forward_pallas.5} parent=0
    _
  %s9 = ssub.s32 1, %s7
  %s10 = scalar_select 0, %s9, %s7
  %s12 = sshll.u32 %s0, 4
  %s13 = int_to_ptr.vmem [resolvable:$true] %s12
  %15 = dma.vmem_to_smem %s13, 16, [#allocation3], [#allocation2]
  %17 = dma.done [#allocation2], 16
  %18 = sfence
  loop: start=0, step=1, limit=4
  $region2: #{forward_pallas.5} parent=0 // loop_pre_header
    _
  $region3: #{forward_pallas.5} parent=0 // loop_header
    %s20 = sphi 0, %s24
    %p21 = scmp.ge.s32.totalorder %s20, 4
    %s30 = sphi 0, %s32
    %s33 = sphi 0, %s30
    %s34 = sphi 0, %s33
    %s50 = sphi 0, %s34
    %s58 = sphi 0, %s60
    %s61 = sphi 0, %s58
    %s62 = sphi 0, %s61
    %s78 = sphi 0, %s62
    %s82 = sphi 0, %s82
    %s84 = sphi 0, %s82
    %s85 = sphi 0, %s84
    %s99 = sphi 0, %s85
    %s103 = sphi 0, %s103
    %s105 = sphi 0, %s103
    %s106 = sphi 0, %s105
    %s120 = sphi 0, %s106
    %s126 = sphi 0, %s128
    %s129 = sphi 0, %s126
    %s130 = sphi 0, %s129
    %s146 = sphi 0, %s130
    %s152 = sphi 0, %s154
    %s155 = sphi 0, %s152
    %s156 = sphi 0, %s155
    %s172 = sphi 0, %s156
  $region4: #{forward_pallas.5} parent=0 // loop_header_branch
    %23 = sbr.rel (%p21) target = $region8
  $region5: #{forward_pallas.5} parent=0 // loop_body
    %s25 = ssub.s32 %s20, 1
    %s26 = ssub.s32 %s20, 2
    %s27 = sadd.s32 %s20, 1
    %s28 = ssub.s32 %s20, %s27
    %p29 = scmp.eq.s32.totalorder %s28, 0
    %s31 = sadd.s32 %s30, 1
    %s32 = scalar_select %p29, %s30, %s31
    %p35 = pneg %p29
    %p36 = scmp.eq.s32.totalorder %s20, 1
    %p37 = por %p35, %p36
    %p38 = scmp.ne.s32.totalorder %s30, %s33
    %p39 = scmp.eq.s32.totalorder %s20, 0
    %p40 = por %p38, %p39
    %p41 = scmp.ne.s32.totalorder %s30, %s33
    %p42 = scmp.eq.s32.totalorder %s25, 1
    %p43 = por %p41, %p42
    %p44 = scmp.ne.s32.totalorder %s33, %s34
    %p45 = scmp.eq.s32.totalorder %s25, 0
    %p46 = por %p44, %p45
    %p47 = scmp.ne.s32.totalorder %s33, %s34
    %p48 = scmp.eq.s32.totalorder %s26, 1
    %p49 = por %p47, %p48
    %p51 = scmp.ne.s32.totalorder %s34, %s50
    %p52 = scmp.eq.s32.totalorder %s26, 0
    %p53 = por %p51, %p52
    %s54 = sld [smem:[#allocation3 + %s20]]
    %s55 = sld [smem:[#allocation3 + %s27]]
    %s56 = ssub.s32 %s54, %s55
    %p57 = scmp.eq.s32.totalorder %s56, 0
    %s59 = sadd.s32 %s58, 1
    %s60 = scalar_select %p57, %s58, %s59
    %p63 = pneg %p57
    %p64 = scmp.eq.s32.totalorder %s20, 1
    %p65 = por %p63, %p64
    %p66 = scmp.ne.s32.totalorder %s58, %s61
    %p67 = scmp.eq.s32.totalorder %s20, 0
    %p68 = por %p66, %p67
    %p69 = scmp.ne.s32.totalorder %s58, %s61
    %p70 = scmp.eq.s32.totalorder %s25, 1
    %p71 = por %p69, %p70
    %p72 = scmp.ne.s32.totalorder %s61, %s62
    %p73 = scmp.eq.s32.totalorder %s25, 0
    %p74 = por %p72, %p73
    %p75 = scmp.ne.s32.totalorder %s61, %s62
    %p76 = scmp.eq.s32.totalorder %s26, 1
    %p77 = por %p75, %p76
    %p79 = scmp.ne.s32.totalorder %s62, %s78
    %p80 = scmp.eq.s32.totalorder %s26, 0
    %p81 = por %p79, %p80
    %s83 = sadd.s32 %s82, 1
    %p86 = scmp.eq.s32.totalorder %s20, 1
    %p87 = scmp.ne.s32.totalorder %s82, %s84
    %p88 = scmp.eq.s32.totalorder %s20, 0
    %p89 = por %p87, %p88
    %p90 = scmp.ne.s32.totalorder %s82, %s84
    %p91 = scmp.eq.s32.totalorder %s25, 1
    %p92 = por %p90, %p91
    %p93 = scmp.ne.s32.totalorder %s84, %s85
    %p94 = scmp.eq.s32.totalorder %s25, 0
    %p95 = por %p93, %p94
    %p96 = scmp.ne.s32.totalorder %s84, %s85
    %p97 = scmp.eq.s32.totalorder %s26, 1
    %p98 = por %p96, %p97
    %p100 = scmp.ne.s32.totalorder %s85, %s99
    %p101 = scmp.eq.s32.totalorder %s26, 0
    %p102 = por %p100, %p101
    %s104 = sadd.s32 %s103, 1
    %p107 = scmp.eq.s32.totalorder %s20, 1
    %p108 = scmp.ne.s32.totalorder %s103, %s105
    %p109 = scmp.eq.s32.totalorder %s20, 0
    %p110 = por %p108, %p109
    %p111 = scmp.ne.s32.totalorder %s103, %s105
    %p112 = scmp.eq.s32.totalorder %s25, 1
    %p113 = por %p111, %p112
    %p114 = scmp.ne.s32.totalorder %s105, %s106
    %p115 = scmp.eq.s32.totalorder %s25, 0
    %p116 = por %p114, %p115
    %p117 = scmp.ne.s32.totalorder %s105, %s106
    %p118 = scmp.eq.s32.totalorder %s26, 1
    %p119 = por %p117, %p118
    %p121 = scmp.ne.s32.totalorder %s106, %s120
    %p122 = scmp.eq.s32.totalorder %s26, 0
    %p123 = por %p121, %p122
    %s124 = ssub.s32 %s20, %s27
    %p125 = scmp.eq.s32.totalorder %s124, 0
    %s127 = sadd.s32 %s126, 1
    %s128 = scalar_select %p125, %s126, %s127
    %p131 = pneg %p125
    %p132 = scmp.eq.s32.totalorder %s20, 1
    %p133 = por %p131, %p132
    %p134 = scmp.ne.s32.totalorder %s126, %s129
    %p135 = scmp.eq.s32.totalorder %s20, 0
    %p136 = por %p134, %p135
    %p137 = scmp.ne.s32.totalorder %s126, %s129
    %p138 = scmp.eq.s32.totalorder %s25, 1
    %p139 = por %p137, %p138
    %p140 = scmp.ne.s32.totalorder %s129, %s130
    %p141 = scmp.eq.s32.totalorder %s25, 0
    %p142 = por %p140, %p141
    %p143 = scmp.ne.s32.totalorder %s129, %s130
    %p144 = scmp.eq.s32.totalorder %s26, 1
    %p145 = por %p143, %p144
    %p147 = scmp.ne.s32.totalorder %s130, %s146
    %p148 = scmp.eq.s32.totalorder %s26, 0
    %p149 = por %p147, %p148
    %s150 = ssub.s32 %s20, %s27
    %p151 = scmp.eq.s32.totalorder %s150, 0
    %s153 = sadd.s32 %s152, 1
    %s154 = scalar_select %p151, %s152, %s153
    %p157 = pneg %p151
    %p158 = scmp.eq.s32.totalorder %s20, 1
    %p159 = por %p157, %p158
    %p160 = scmp.ne.s32.totalorder %s152, %s155
    %p161 = scmp.eq.s32.totalorder %s20, 0
    %p162 = por %p160, %p161
    %p163 = scmp.ne.s32.totalorder %s152, %s155
    %p164 = scmp.eq.s32.totalorder %s25, 1
    %p165 = por %p163, %p164
    %p166 = scmp.ne.s32.totalorder %s155, %s156
    %p167 = scmp.eq.s32.totalorder %s25, 0
    %p168 = por %p166, %p167
    %p169 = scmp.ne.s32.totalorder %s155, %s156
    %p170 = scmp.eq.s32.totalorder %s26, 1
    %p171 = por %p169, %p170
    %p173 = scmp.ne.s32.totalorder %s156, %s172
    %p174 = scmp.eq.s32.totalorder %s26, 0
    %p175 = por %p173, %p174
    %p176 = scmp.le.s32.totalorder 1, %s20
    %p177 = scmp.lt.s32.totalorder %s20, 3
    %p178 = pnand %p176, %p177
    %p179 = pneg %p178
    // Predicated region
    $region9: #{forward_pallas.5} parent=5 // pred_check
      _
    $region10: #{forward_pallas.5} parent=5 // pred_check_branch
      %181 = sbr.rel (%p178) target = $region12
    $region11: #{forward_pallas.5} parent=5 // pred_region
      %s182 = ssub.s32 %s20, 1
      // Predicated region
      $region13: #{forward_pallas.5} parent=11 // pred_check
        %p183 = pneg %p95
      $region14: #{forward_pallas.5} parent=11 // pred_check_branch
        %185 = sbr.rel (%p183) target = $region16
      $region15: #{forward_pallas.5} parent=11 // pred_region
        _
      $region16: #{forward_pallas.5} parent=11 // pred_fallthru
        _
      // Predicated region
      $region17: #{forward_pallas.5} parent=11 // pred_check
        %p186 = pneg %p116
      $region18: #{forward_pallas.5} parent=11 // pred_check_branch
        %188 = sbr.rel (%p186) target = $region20
      $region19: #{forward_pallas.5} parent=11 // pred_region
        _
      $region20: #{forward_pallas.5} parent=11 // pred_fallthru
        _
    $region12: #{forward_pallas.5} parent=5 // pred_fallthru
      _
    %p189 = scmp.lt.s32.totalorder %s20, 2
    // Predicated region
    $region21: #{forward_pallas.5} parent=5 // pred_check
      %p190 = pneg %p189
    $region22: #{forward_pallas.5} parent=5 // pred_check_branch
      %192 = sbr.rel (%p190) target = $region24
    $region23: #{forward_pallas.5} parent=5 // pred_region
      // Predicated region
      $region25: #{forward_pallas.5} parent=23 // pred_check
        %p193 = pneg %p40
      $region26: #{forward_pallas.5} parent=23 // pred_check_branch
        %195 = sbr.rel (%p193) target = $region28
      $region27: #{forward_pallas.5} parent=23 // pred_region
        %s196 = smul.u32 16, %s20
        %p197 = scmp.lt.s32.totalorder %s196, 31
        %s198 = scalar_select %p197, %s196, 31
        %s199 = smul.addr %s198, 4
        %s200 = scalar_lea.vmem %s1, %s199
        %s201 = smul.u32 16, %s20
      $region28: #{forward_pallas.5} parent=23 // pred_fallthru
        _
      // Predicated region
      $region29: #{forward_pallas.5} parent=23 // pred_check
        %p202 = pneg %p68
      $region30: #{forward_pallas.5} parent=23 // pred_check_branch
        %204 = sbr.rel (%p202) target = $region32
      $region31: #{forward_pallas.5} parent=23 // pred_region
        %s205 = sld [smem:[#allocation3 + %s20]]
        %p206 = scmp.lt.s32.totalorder %s205, 1
        %s207 = scalar_select %p206, %s205, 1
        %s208 = smul.addr %s207, 9
        %s209 = smul.addr %s208, 4
        %s210 = scalar_lea.vmem %s2, %s209
        %s211 = sld [smem:[#allocation3 + %s20]]
      $region32: #{forward_pallas.5} parent=23 // pred_fallthru
        _
      // Predicated region
      $region33: #{forward_pallas.5} parent=23 // pred_check
        %p212 = pneg %p136
      $region34: #{forward_pallas.5} parent=23 // pred_check_branch
        %214 = sbr.rel (%p212) target = $region36
      $region35: #{forward_pallas.5} parent=23 // pred_region
        %s215 = smul.u32 16, %s20
        %p216 = scmp.lt.s32.totalorder %s215, 31
        %s217 = scalar_select %p216, %s215, 31
        %s218 = smul.addr %s217, 4
        %s219 = scalar_lea.vmem %s5, %s218
        %s220 = smul.u32 16, %s20
      $region36: #{forward_pallas.5} parent=23 // pred_fallthru
        _
    $region24: #{forward_pallas.5} parent=5 // pred_fallthru
      _
    %p221 = scmp.le.s32.totalorder 1, %s20
    %p222 = scmp.lt.s32.totalorder %s20, 3
    %p223 = pnand %p221, %p222
    %p224 = pneg %p223
    // Predicated region
    $region37: #{forward_pallas.5} parent=5 // pred_check
      _
    $region38: #{forward_pallas.5} parent=5 // pred_check_branch
      %226 = sbr.rel (%p223) target = $region40
    $region39: #{forward_pallas.5} parent=5 // pred_region
      %s227 = ssub.s32 %s20, 1
      %s228 = smul.u32 16, %s25
      %p229 = scmp.lt.s32.totalorder %s228, 31
      %s230 = scalar_select %p229, %s228, 31
      %s231 = smul.addr %s230, 4
      %s232 = scalar_lea.vmem %s1, %s231
      %p233 = pneg %p46
      %p234 = pneg %p43
      %s235 = sld [smem:[#allocation3 + %s25]]
      %p236 = scmp.lt.s32.totalorder %s235, 1
      %s237 = scalar_select %p236, %s235, 1
      %s238 = smul.addr %s237, 9
      %s239 = smul.addr %s238, 4
      %s240 = scalar_lea.vmem %s2, %s239
      %p241 = pneg %p74
      %p242 = pneg %p71
      %p243 = pneg %p95
      %p244 = pneg %p92
      %p245 = pneg %p116
      %p246 = pneg %p113
      %s247 = smul.u32 16, %s25
      %p248 = scmp.lt.s32.totalorder %s247, 31
      %s249 = scalar_select %p248, %s247, 31
      %s250 = smul.addr %s249, 4
      %s251 = scalar_lea.vmem %s5, %s250
      %p252 = pneg %p142
      %p253 = pneg %p139
      %p254 = pneg %p168
      %p255 = pneg %p165
      %s256 = smul.u32 16, %s25
      %p257 = scmp.lt.s32.totalorder %s256, 31
      %s258 = scalar_select %p257, %s256, 31
      %s259 = smul.addr %s258, 8
      %s260 = scalar_lea.vmem %s6, %s259
      %s261 = smul.u32 16, %s25
      %p262 = scmp.lt.s32.totalorder %s261, 31
      %s263 = scalar_select %p262, %s261, 31
      %s264 = smul.addr %s263, 4
      %s265 = scalar_lea.vmem %s1, %s264
      %s266 = smul.u32 16, %s25
      %s267 = sld [smem:[#allocation3 + %s25]]
      %p268 = scmp.lt.s32.totalorder %s267, 1
      %s269 = scalar_select %p268, %s267, 1
      %s270 = smul.addr %s269, 9
      %s271 = smul.addr %s270, 4
      %s272 = scalar_lea.vmem %s2, %s271
      %s273 = sld [smem:[#allocation3 + %s25]]
      %s274 = smul.u32 16, %s25
      %p275 = scmp.lt.s32.totalorder %s274, 31
      %s276 = scalar_select %p275, %s274, 31
      %s277 = smul.addr %s276, 4
      %s278 = scalar_lea.vmem %s5, %s277
      %s279 = smul.u32 16, %s25
      %s280 = smul.u32 16, %s25
      %p281 = scmp.lt.s32.totalorder %s280, 31
      %s282 = scalar_select %p281, %s280, 31
      %s283 = smul.addr %s282, 8
      %s284 = scalar_lea.vmem %s6, %s283
      %s285 = smul.u32 16, %s25
      %v287 = vld [vmem:[%s265] sm:$0xf]
      %v288 = vld [vmem:[%s265 + $0x4] sm:$0xf]
      %v289 = vld [vmem:[%s265 + $0x8] sm:$0xf]
      %v290 = vld [vmem:[%s265 + $0xc] sm:$0xf]
      %v291 = vld [vmem:[%s265 + $0x10] sm:$0xf]
      %v292 = vld [vmem:[%s265 + $0x14] sm:$0xf]
      %v293 = vld [vmem:[%s265 + $0x18] sm:$0xf]
      %v294 = vld [vmem:[%s265 + $0x1c] sm:$0xf]
      %v295 = vld [vmem:[%s265 + $0x20] sm:$0xf]
      %v296 = vld [vmem:[%s265 + $0x24] sm:$0xf]
      %v297 = vld [vmem:[%s265 + $0x28] sm:$0xf]
      %v298 = vld [vmem:[%s265 + $0x2c] sm:$0xf]
      %v299 = vld [vmem:[%s265 + $0x30] sm:$0xf]
      %v300 = vld [vmem:[%s265 + $0x34] sm:$0xf]
      %v301 = vld [vmem:[%s265 + $0x38] sm:$0xf]
      %v302 = vld [vmem:[%s265 + $0x3c] sm:$0xf]
      %v303 = vld [vmem:[%s272] sm:$0xf]
      %v304 = vld [vmem:[%s272 + $0x4] sm:$0xf]
      %v305 = vld [vmem:[%s272 + $0x8] sm:$0xf]
      %v306 = vld [vmem:[%s272 + $0xc] sm:$0xf]
      %v307 = vld [vmem:[%s272 + $0x10] sm:$0xf]
      %v308 = vld [vmem:[%s272 + $0x14] sm:$0xf]
      %v309 = vld [vmem:[%s272 + $0x18] sm:$0xf]
      %v310 = vld [vmem:[%s272 + $0x1c] sm:$0xf]
      %v311 = vld [vmem:[%s272 + $0x20] sm:$0xf]
      %v312 = vld [vmem:[%s278] sm:$0xf]
      %v313 = vld [vmem:[%s278 + $0x4] sm:$0xf]
      %v314 = vld [vmem:[%s278 + $0x8] sm:$0xf]
      %v315 = vld [vmem:[%s278 + $0xc] sm:$0xf]
      %v316 = vld [vmem:[%s278 + $0x10] sm:$0xf]
      %v317 = vld [vmem:[%s278 + $0x14] sm:$0xf]
      %v318 = vld [vmem:[%s278 + $0x18] sm:$0xf]
      %v319 = vld [vmem:[%s278 + $0x1c] sm:$0xf]
      %v320 = vld [vmem:[%s278 + $0x20] sm:$0xf]
      %v321 = vld [vmem:[%s278 + $0x24] sm:$0xf]
      %v322 = vld [vmem:[%s278 + $0x28] sm:$0xf]
      %v323 = vld [vmem:[%s278 + $0x2c] sm:$0xf]
      %v324 = vld [vmem:[%s278 + $0x30] sm:$0xf]
      %v325 = vld [vmem:[%s278 + $0x34] sm:$0xf]
      %v326 = vld [vmem:[%s278 + $0x38] sm:$0xf]
      %v327 = vld [vmem:[%s278 + $0x3c] sm:$0xf]
      %v328 = vunpack.c.l.bf16 %v312
      %v329 = vunpack.c.l.bf16 %v313
      %v330 = vunpack.c.l.bf16 %v314
      %v331 = vunpack.c.l.bf16 %v315
      %v332 = vunpack.c.l.bf16 %v316
      %v333 = vunpack.c.l.bf16 %v317
      %v334 = vunpack.c.l.bf16 %v318
      %v335 = vunpack.c.l.bf16 %v319
      %v336 = vunpack.c.l.bf16 %v320
      %v337 = vunpack.c.l.bf16 %v321
      %v338 = vunpack.c.l.bf16 %v322
      %v339 = vunpack.c.l.bf16 %v323
      %v340 = vunpack.c.l.bf16 %v324
      %v341 = vunpack.c.l.bf16 %v325
      %v342 = vunpack.c.l.bf16 %v326
      %v343 = vunpack.c.l.bf16 %v327
      %v360 = vunpack.c.l.b16 %v287
      %v361 = vunpack.c.l.b16 %v288
      %v362 = vunpack.c.l.b16 %v289
      %v363 = vunpack.c.l.b16 %v290
      %v364 = vunpack.c.l.b16 %v291
      %v365 = vunpack.c.l.b16 %v292
      %v366 = vunpack.c.l.b16 %v293
      %v367 = vunpack.c.l.b16 %v294
      %v368 = vunpack.c.l.b16 %v295
      %v369 = vunpack.c.l.b16 %v296
      %v370 = vunpack.c.l.b16 %v297
      %v371 = vunpack.c.l.b16 %v298
      %v372 = vunpack.c.l.b16 %v299
      %v373 = vunpack.c.l.b16 %v300
      %v374 = vunpack.c.l.b16 %v301
      %v375 = vunpack.c.l.b16 %v302
      %v376 = vpack.c.b16 %v361, %v360
      %v377 = vpack.c.b16 %v363, %v362
      %v378 = vpack.c.b16 %v365, %v364
      %v379 = vpack.c.b16 %v367, %v366
      %v380 = vpack.c.b16 %v369, %v368
      %v381 = vpack.c.b16 %v371, %v370
      %v382 = vpack.c.b16 %v373, %v372
      %v383 = vpack.c.b16 %v375, %v374
      %v393 = vunpack.c.l.b16 %v303
      %v394 = vunpack.c.l.b16 %v304
      %v395 = vunpack.c.l.b16 %v305
      %v396 = vunpack.c.l.b16 %v306
      %v397 = vunpack.c.l.b16 %v307
      %v398 = vunpack.c.l.b16 %v308
      %v399 = vunpack.c.l.b16 %v309
      %v400 = vunpack.c.l.b16 %v310
      %v401 = vunpack.c.l.b16 %v311
      %v402 = vpack.c.b16 %v394, %v393
      %v403 = vpack.c.b16 %v396, %v395
      %v404 = vpack.c.b16 %v398, %v397
      %v405 = vpack.c.b16 %v400, %v399
      %v406 = vpack.c.b16 %v401, %v401
      %vm411 = vcmask 588800
      %v413 = vsel %vm411, %v376, 0
      %v416 = vsel %vm411, %v377, 0
      %v419 = vsel %vm411, %v378, 0
      %v422 = vsel %vm411, %v379, 0
      %v425 = vsel %vm411, %v380, 0
      %v428 = vsel %vm411, %v381, 0
      %v431 = vsel %vm411, %v382, 0
      %v434 = vsel %vm411, %v383, 0
      %vm436 = vcmask 1043456
      %v438 = vsel %vm436, %v406, 0
      %440 = vmatpush.bf16.msra.mxu0 0
      %441 = vmatpush.bf16.msra.mxu0 0
      %442 = vmatpush.bf16.msra.mxu0 0
      %443 = vmatpush.bf16.msra.mxu0 %v438
      %444 = vmatpush.bf16.msra.mxu0 %v405
      %445 = vmatpush.bf16.msra.mxu0 %v404
      %446 = vmatpush.bf16.msra.mxu0 %v403
      %447 = vmatpush.bf16.msra.mxu0 %v402
      %448 = vmatmul.bf16.gmra.mxu0 %v413
      %v449 = vpop.f32.mrf.mxu0
      %v450 = vadd.f32 %v328, %v449
      %v451 = vpop.f32.mrf.mxu0
      %v452 = vadd.f32 %v329, %v451
      %453 = vmatmul.bf16.gmra.mxu0 %v416
      %v454 = vpop.f32.mrf.mxu0
      %v455 = vadd.f32 %v330, %v454
      %v456 = vpop.f32.mrf.mxu0
      %v457 = vadd.f32 %v331, %v456
      %458 = vmatmul.bf16.gmra.mxu0 %v419
      %v459 = vpop.f32.mrf.mxu0
      %v460 = vadd.f32 %v332, %v459
      %v461 = vpop.f32.mrf.mxu0
      %v462 = vadd.f32 %v333, %v461
      %463 = vmatmul.bf16.gmra.mxu0 %v422
      %v464 = vpop.f32.mrf.mxu0
      %v465 = vadd.f32 %v334, %v464
      %v466 = vpop.f32.mrf.mxu0
      %v467 = vadd.f32 %v335, %v466
      %468 = vmatmul.bf16.gmra.mxu0 %v425
      %v469 = vpop.f32.mrf.mxu0
      %v470 = vadd.f32 %v336, %v469
      %v471 = vpop.f32.mrf.mxu0
      %v472 = vadd.f32 %v337, %v471
      %473 = vmatmul.bf16.gmra.mxu0 %v428
      %v474 = vpop.f32.mrf.mxu0
      %v475 = vadd.f32 %v338, %v474
      %v476 = vpop.f32.mrf.mxu0
      %v477 = vadd.f32 %v339, %v476
      %478 = vmatmul.bf16.gmra.mxu0 %v431
      %v479 = vpop.f32.mrf.mxu0
      %v480 = vadd.f32 %v340, %v479
      %v481 = vpop.f32.mrf.mxu0
      %v482 = vadd.f32 %v341, %v481
      %483 = vmatmul.bf16.gmra.mxu0 %v434
      %v484 = vpop.f32.mrf.mxu0
      %v485 = vadd.f32 %v342, %v484
      %v486 = vpop.f32.mrf.mxu0
      %v487 = vadd.f32 %v343, %v486
      %488 = vdwg.mxu0
      %v489 = vld [vmem:[%s3] sm:$0x1]
      %v491 = vperm.slane %v489, 0
      %v493 = vmul.f32 %v450, %v491
      %v494 = vmul.f32 %v452, %v491
      %v495 = vmul.f32 %v455, %v491
      %v496 = vmul.f32 %v457, %v491
      %v497 = vmul.f32 %v460, %v491
      %v498 = vmul.f32 %v462, %v491
      %v499 = vmul.f32 %v465, %v491
      %v500 = vmul.f32 %v467, %v491
      %v501 = vmul.f32 %v470, %v491
      %v502 = vmul.f32 %v472, %v491
      %v503 = vmul.f32 %v475, %v491
      %v504 = vmul.f32 %v477, %v491
      %v505 = vmul.f32 %v480, %v491
      %v506 = vmul.f32 %v482, %v491
      %v507 = vmul.f32 %v485, %v491
      %v508 = vmul.f32 %v487, %v491
      %v509 = vld [vmem:[%s4] sm:$0x1]
      %v511 = vperm.slane %v509, 0
      %v513 = vadd.f32 %v493, %v511
      %v514 = vadd.f32 %v494, %v511
      %v515 = vadd.f32 %v495, %v511
      %v516 = vadd.f32 %v496, %v511
      %v517 = vadd.f32 %v497, %v511
      %v518 = vadd.f32 %v498, %v511
      %v519 = vadd.f32 %v499, %v511
      %v520 = vadd.f32 %v500, %v511
      %v521 = vadd.f32 %v501, %v511
      %v522 = vadd.f32 %v502, %v511
      %v523 = vadd.f32 %v503, %v511
      %v524 = vadd.f32 %v504, %v511
      %v525 = vadd.f32 %v505, %v511
      %v526 = vadd.f32 %v506, %v511
      %v527 = vadd.f32 %v507, %v511
      %v528 = vadd.f32 %v508, %v511
      %v529 = vmax.f32 %v513, 0.0
      %v530 = vmax.f32 %v514, 0.0
      %v531 = vmax.f32 %v515, 0.0
      %v532 = vmax.f32 %v516, 0.0
      %v533 = vmax.f32 %v517, 0.0
      %v534 = vmax.f32 %v518, 0.0
      %v535 = vmax.f32 %v519, 0.0
      %v536 = vmax.f32 %v520, 0.0
      %v537 = vmax.f32 %v521, 0.0
      %v538 = vmax.f32 %v522, 0.0
      %v539 = vmax.f32 %v523, 0.0
      %v540 = vmax.f32 %v524, 0.0
      %v541 = vmax.f32 %v525, 0.0
      %v542 = vmax.f32 %v526, 0.0
      %v543 = vmax.f32 %v527, 0.0
      %v544 = vmax.f32 %v528, 0.0
      %545 = vst [vmem:[%s284] sm:$0xff] %v529
      %546 = vst [vmem:[%s284 + $0x8] sm:$0xff] %v530
      %547 = vst [vmem:[%s284 + $0x10] sm:$0xff] %v531
      %548 = vst [vmem:[%s284 + $0x18] sm:$0xff] %v532
      %549 = vst [vmem:[%s284 + $0x20] sm:$0xff] %v533
      %550 = vst [vmem:[%s284 + $0x28] sm:$0xff] %v534
      %551 = vst [vmem:[%s284 + $0x30] sm:$0xff] %v535
      %552 = vst [vmem:[%s284 + $0x38] sm:$0xff] %v536
      %553 = vst [vmem:[%s284 + $0x40] sm:$0xff] %v537
      %554 = vst [vmem:[%s284 + $0x48] sm:$0xff] %v538
      %555 = vst [vmem:[%s284 + $0x50] sm:$0xff] %v539
      %556 = vst [vmem:[%s284 + $0x58] sm:$0xff] %v540
      %557 = vst [vmem:[%s284 + $0x60] sm:$0xff] %v541
      %558 = vst [vmem:[%s284 + $0x68] sm:$0xff] %v542
      %559 = vst [vmem:[%s284 + $0x70] sm:$0xff] %v543
      %560 = vst [vmem:[%s284 + $0x78] sm:$0xff] %v544
      %s561 = smul.u32 16, %s25
      %p562 = scmp.lt.s32.totalorder %s561, 31
      %s563 = scalar_select %p562, %s561, 31
      %s564 = smul.addr %s563, 8
      %s565 = scalar_lea.vmem %s6, %s564
      // Predicated region
      $region41: #{forward_pallas.5} parent=39 // pred_check
        %p566 = pneg %p165
      $region42: #{forward_pallas.5} parent=39 // pred_check_branch
        %568 = sbr.rel (%p566) target = $region44
      $region43: #{forward_pallas.5} parent=39 // pred_region
        %s569 = smul.u32 16, %s25
      $region44: #{forward_pallas.5} parent=39 // pred_fallthru
        _
    $region40: #{forward_pallas.5} parent=5 // pred_fallthru
      _
    %p570 = scmp.le.s32.totalorder 2, %s20
    // Predicated region
    $region45: #{forward_pallas.5} parent=5 // pred_check
      %p571 = pneg %p570
    $region46: #{forward_pallas.5} parent=5 // pred_check_branch
      %573 = sbr.rel (%p571) target = $region48
    $region47: #{forward_pallas.5} parent=5 // pred_region
      %s574 = ssub.s32 %s20, 2
      // Predicated region
      $region49: #{forward_pallas.5} parent=47 // pred_check
        %p575 = pneg %p171
      $region50: #{forward_pallas.5} parent=47 // pred_check_branch
        %577 = sbr.rel (%p575) target = $region52
      $region51: #{forward_pallas.5} parent=47 // pred_region
        %s578 = smul.u32 16, %s26
        %p579 = scmp.lt.s32.totalorder %s578, 31
        %s580 = scalar_select %p579, %s578, 31
        %s581 = smul.addr %s580, 8
        %s582 = scalar_lea.vmem %s6, %s581
      $region52: #{forward_pallas.5} parent=47 // pred_fallthru
        _
    $region48: #{forward_pallas.5} parent=5 // pred_fallthru
      _
  $region6: #{forward_pallas.5} parent=0 // loop_footer
    %s24 = sadd.s32 1, %s20
  $region7: #{forward_pallas.5} parent=0 // loop_footer_branch
    %19 = sbr.rel target = $region3
  $region8: #{forward_pallas.5} parent=0 // loop_exit
    _

</llo_original>
